<compile_context>
chip_gen: v5e
topology: v5e:2x2
jax: 0.10.0
libtpu: 0.0.40
codegen_flags: <defaults>
</compile_context>

<pallas_src>
import functools

import jax
import jax.numpy as jnp
import numpy as np
from jax.experimental import pallas as pl
from jax.experimental.pallas import tpu as pltpu

# TODO(synk): `self.base.forward_features(x, pool=False)` depends on an
# arbitrary backbone and is not part of this head; treated as identity here.


def _round_up(n, m):
    return ((n + m - 1) // m) * m


def _ttp_kernel(x_ref, w_ref, b_ref, o_ref, *, pool):
    """Processes one batch tile per grid step.

    x_ref: (Bt, H, W, C)  feature-map tile (NHWC, producer dtype)
    w_ref: (C, Kp)        1x1-conv weight, channels-in major, K padded to 128
    b_ref: (1, Kp)        conv bias (f32, zero-padded)
    o_ref: (Bt, Kp)       per-sample class logits (f32)
    """
    Bt, H, W, C = x_ref.shape
    Ho = H - pool + 1
    Wo = W - pool + 1

    # Row (H) pass of the separable stride-1 sum pool. Each shifted slice is
    # read and cast straight off the ref (no full-tile f32 materialization).
    r = x_ref[:, 0:Ho, :, :].astype(jnp.float32)
    for di in range(1, pool):
        r = r + x_ref[:, di:di + Ho, :, :].astype(jnp.float32)   # (Bt,Ho,W,C)

    # Column (W) pass: shifted adds along the sublane axis.
    # (v7x note: these sublane shifts could be moved to the XLU with
    #  pltpu.roll(r, W - dj, axis=2) + a single final slice; on v5e/v6e this
    #  work is hidden under the HBM bound so the simpler form is kept.)
    acc = r[:, :, 0:Wo, :]
    for dj in range(1, pool):
        acc = acc + r[:, :, dj:dj + Wo, :]                        # (Bt,Ho,Wo,C)
    y = acc * (1.0 / float(pool * pool))

    # 1x1 conv == channel matmul on the MXU; f32 accumulation.
    y2 = y.reshape(Bt * Ho * Wo, C).astype(w_ref.dtype)
    z = jnp.dot(y2, w_ref[...], preferred_element_type=jnp.float32)
    z = z.reshape(Bt, Ho * Wo, -1)                                # (Bt, S, Kp)

    # adaptive_avgmax_pool2d(., 1) == 0.5*(mean + max); the conv bias is a
    # per-channel constant, so it commutes with mean/max and is added last.
    out = 0.5 * (jnp.mean(z, axis=1) + jnp.max(z, axis=1)) + b_ref[...]
    o_ref[...] = out.astype(o_ref.dtype)                          # (Bt, Kp)


def _vmem_capacity_bytes():
    try:
        cap = int(pltpu.get_tpu_info().vmem_capacity_bytes)
        if cap > 0:
            return cap
    except Exception:
        pass
    return 64 << 20   # conservative default: v7x per-TensorCore VMEM


def _auto_batch_tile(B, H, W, C, Kp, x_item, pool, vmem_cap):
    """Pick Bt so the full per-step footprint fits comfortably in VMEM."""
    Ho, Wo = H - pool + 1, W - pool + 1
    budget = vmem_cap * 3 // 4                      # pipeline/compiler headroom
    fixed = C * Kp * x_item + 8 * Kp * 4 + (4 << 20)  # weight + bias + slack
    per_sample = (2 * H * W * C * x_item            # x block (double-buffered)
                  + Ho * W * C * 4                  # row-pass accumulator (f32)
                  + Ho * Wo * C * 4                 # pooled y (f32)
                  + Ho * Wo * max(C, Kp) * 4        # matmul staging / z (f32)
                  + 2 * Kp * 4)                     # out block (double-buffered)
    bt = max(1, (budget - fixed) // per_sample)
    bt = int(min(bt, 64, B))
    if B >= 16:
        bt = min(bt, B // 2)          # >= 2 grid steps so both v7x TCs get work
    if B >= 8:
        bt = max(8, (bt // 8) * 8)    # output-block sublane alignment
    else:
        bt = B
    return bt


def test_time_pool_head_nhwc(x_nhwc, weight_kc, bias_k, *, original_pool=7,
                             batch_tile=None):
    """Primary entry point.

    x_nhwc:    (B, H, W, C) feature map in the producer's dtype (C on lanes).
               It is passed straight to the kernel: no cast, pad or transpose.
    weight_kc: (K, C)  1x1-conv weight (PyTorch (K, C, 1, 1) squeezed).
    bias_k:    (K,)    conv bias.
    Returns (B, K) float32 logits.
    """
    B, H, W, C = x_nhwc.shape
    K = weight_kc.shape[0]
    pool = int(original_pool)
    assert H >= pool and W >= pool
    Ho, Wo = H - pool + 1, W - pool + 1
    S = Ho * Wo

    Kp = _round_up(K, 128)                          # lane-dense output block
    x_item = jnp.dtype(x_nhwc.dtype).itemsize

    # Tiny parameter prep (O(C*K) elements; x itself is untouched).
    w_ck = jnp.transpose(weight_kc, (1, 0)).astype(x_nhwc.dtype)
    if Kp != K:
        w_ck = jnp.pad(w_ck, ((0, 0), (0, Kp - K)))
    w_item = jnp.dtype(w_ck.dtype).itemsize
    b_1k = bias_k.astype(jnp.float32).reshape(1, K)
    if Kp != K:
        b_1k = jnp.pad(b_1k, ((0, 0), (0, Kp - K)))

    vmem_cap = _vmem_capacity_bytes()
    if batch_tile is None:
        Bt = _auto_batch_tile(B, H, W, C, Kp, x_item, pool, vmem_cap)
    else:
        Bt = int(min(batch_tile, B))
        Bt = max(8, (Bt // 8) * 8) if B >= 8 else B

    grid = (pl.cdiv(B, Bt),)                        # partial last block allowed

    # Complete per-step VMEM footprint (x blocks + f32 temporaries + params +
    # out blocks), with headroom but capped below the chip's physical VMEM.
    est = (C * Kp * w_item + 8 * Kp * 4
           + 2 * Bt * H * W * C * x_item
           + Bt * (Ho * W * C + S * C + S * Kp) * 4
           + 2 * max(Bt, 8) * Kp * 4)
    vmem_limit = max(2 * est, 16 << 20)
    vmem_limit = min(vmem_limit, vmem_cap * 85 // 100)
    vmem_limit = max(vmem_limit, est + (2 << 20))
    vmem_limit = int(min(vmem_limit, vmem_cap))

    flops = (B * C * (pool - 1) * (Ho * W + S)      # separable pooling adds
             + 2 * B * S * C * Kp                   # 1x1-conv matmul
             + 4 * B * S * Kp)                      # avg/max epilogue
    bytes_accessed = (B * H * W * C * x_item + C * Kp * w_item
                      + Kp * 4 + B * Kp * 4)
    cost = pl.CostEstimate(flops=int(flops), transcendentals=0,
                           bytes_accessed=int(bytes_accessed))

    kernel = functools.partial(_ttp_kernel, pool=pool)
    out_shape = jax.ShapeDtypeStruct((B, Kp), jnp.float32)

    def _param_spec(shape, single_buffer):
        # Grid-invariant blocks: single-buffer to save VMEM when supported.
        if single_buffer:
            return pl.BlockSpec(shape, lambda b: (0,) * len(shape),
                                pipeline_mode=pl.Buffered(1))
        return pl.BlockSpec(shape, lambda b: (0,) * len(shape))

    def _run(optimized):
        return pl.pallas_call(
            kernel,
            out_shape=out_shape,
            grid_spec=pltpu.PrefetchScalarGridSpec(
                num_scalar_prefetch=0,
                grid=grid,
                in_specs=[
                    pl.BlockSpec((Bt, H, W, C), lambda b: (b, 0, 0, 0)),
                    _param_spec((C, Kp), optimized),
                    _param_spec((1, Kp), optimized),
                ],
                out_specs=pl.BlockSpec((Bt, Kp), lambda b: (b, 0)),
            ),
            compiler_params=pltpu.CompilerParams(
                dimension_semantics=("parallel",),
                vmem_limit_bytes=vmem_limit),
            cost_estimate=cost if optimized else None,
        )(x_nhwc, w_ck, b_1k)

    try:
        out = _run(True)
    except Exception:
        # Fallback for JAX versions without BlockSpec(pipeline_mode=...) /
        # Buffered(1); numerics are identical, only buffering differs.
        out = _run(False)

    return out[:, :K]                               # x.view(B, -1)


def test_time_pool_head(x_nchw, weight_kc, bias_k, **kwargs):
    """NCHW convenience adapter (costs one extra HBM pass of x for the
    transpose). Production callers should feed NHWC directly."""
    return test_time_pool_head_nhwc(
        jnp.transpose(x_nchw, (0, 2, 3, 1)), weight_kc, bias_k, **kwargs)


def _reference_nhwc(x_nhwc, weight_kc, bias_k, *, original_pool=7):
    """Pure-JAX f32 reference mirroring the PyTorch ops (NHWC layout)."""
    B, H, W, C = x_nhwc.shape
    P = original_pool
    Ho, Wo = H - P + 1, W - P + 1
    x = x_nhwc.astype(jnp.float32)
    acc = jnp.zeros((B, Ho, Wo, C), jnp.float32)
    for di in range(P):
        for dj in range(P):
            acc = acc + x[:, di:di + Ho, dj:dj + Wo, :]
    y = acc / (P * P)                                      # (B, Ho, Wo, C)
    z = jnp.einsum("bhwc,kc->bhwk", y, weight_kc.astype(jnp.float32))
    z = z + bias_k.astype(jnp.float32)[None, None, None, :]
    z_flat = z.reshape(B, Ho * Wo, -1)
    return 0.5 * (jnp.mean(z_flat, 1) + jnp.max(z_flat, 1))


if __name__ == "__main__":
    # Small shapes consistent with the module: B=10 (exercises batch tiling,
    # a partial last block and a 2-step grid), num_features=32, num_classes=16,
    # spatial 8x8, original_pool=7 -> pooled spatial 2x2.
    B, H, W, C = 10, 8, 8, 32
    K = 16
    POOL = 7

    key = jax.random.PRNGKey(0)
    kx, kw, kb = jax.random.split(key, 3)
    # The backbone is assumed to hand the feature map over in bf16 NHWC; the
    # wrapper performs no cast / pad / transpose on it.
    x_nhwc = jax.random.normal(kx, (B, H, W, C), dtype=jnp.float32).astype(
        jnp.bfloat16)
    # nn.Conv2d(C, K, kernel_size=1, bias=True): weight (K, C, 1, 1), bias (K,)
    weight = jax.random.normal(kw, (K, C), dtype=jnp.float32) * 0.05
    bias = jax.random.normal(kb, (K,), dtype=jnp.float32) * 0.05

    out = test_time_pool_head_nhwc(x_nhwc, weight, bias, original_pool=POOL)
    out = jax.block_until_ready(out)

    ref = _reference_nhwc(x_nhwc, weight, bias, original_pool=POOL)
    # bf16 input/weight -> slightly looser tolerance (accumulation is f32).
    np.testing.assert_allclose(np.asarray(out), np.asarray(ref),
                               rtol=1e-2, atol=1e-2)
    assert out.shape == (B, K)
    print("KERNEL_OK")
</pallas_src>

<mosaic_0001>
module attributes {stable_mosaic.version = 11 : i64} {
  func.func @_ttp_kernel(%arg0: i32, %arg1: memref<8x8x8x32xbf16, #tpu.memory_space<vmem>>, %arg2: memref<32x128xbf16, #tpu.memory_space<vmem>>, %arg3: memref<1x128xf32, #tpu.memory_space<vmem>>, %arg4: memref<8x128xf32, #tpu.memory_space<vmem>>) attributes {dimension_semantics = [#tpu.dimension_semantics<parallel>], iteration_bounds = array<i64: 2>, scalar_prefetch = 0 : i64, scratch_operands = 0 : i64, tpu.core_type = #tpu.core_type<tc>, window_params = [{transform_indices = @transform_0, window_bounds = array<i64: 8, 8, 8, 32>}, {pipeline_mode = #tpu.pipeline_mode<synchronous>, transform_indices = @transform_1, window_bounds = array<i64: 32, 128>}, {pipeline_mode = #tpu.pipeline_mode<synchronous>, transform_indices = @transform_2, window_bounds = array<i64: 1, 128>}, {transform_indices = @transform_3, window_bounds = array<i64: 8, 128>}]} {
    %c0 = arith.constant 0 : index
    %c0_0 = arith.constant 0 : index
    %c0_1 = arith.constant 0 : index
    %c0_2 = arith.constant 0 : index
    %0 = vector.load %arg1[%c0, %c0_0, %c0_1, %c0_2] : memref<8x8x8x32xbf16, #tpu.memory_space<vmem>>, vector<8x2x8x32xbf16>
    %1 = arith.extf %0 : vector<8x2x8x32xbf16> to vector<8x2x8x32xf32>
    %c0_3 = arith.constant 0 : index
    %c1 = arith.constant 1 : index
    %c0_4 = arith.constant 0 : index
    %c0_5 = arith.constant 0 : index
    %2 = vector.load %arg1[%c0_3, %c1, %c0_4, %c0_5] : memref<8x8x8x32xbf16, #tpu.memory_space<vmem>>, vector<8x2x8x32xbf16>
    %3 = arith.extf %2 : vector<8x2x8x32xbf16> to vector<8x2x8x32xf32>
    %4 = arith.addf %1, %3 : vector<8x2x8x32xf32>
    %c0_6 = arith.constant 0 : index
    %c2 = arith.constant 2 : index
    %c0_7 = arith.constant 0 : index
    %c0_8 = arith.constant 0 : index
    %5 = vector.load %arg1[%c0_6, %c2, %c0_7, %c0_8] : memref<8x8x8x32xbf16, #tpu.memory_space<vmem>>, vector<8x2x8x32xbf16>
    %6 = arith.extf %5 : vector<8x2x8x32xbf16> to vector<8x2x8x32xf32>
    %7 = arith.addf %4, %6 : vector<8x2x8x32xf32>
    %c0_9 = arith.constant 0 : index
    %c3 = arith.constant 3 : index
    %c0_10 = arith.constant 0 : index
    %c0_11 = arith.constant 0 : index
    %8 = vector.load %arg1[%c0_9, %c3, %c0_10, %c0_11] : memref<8x8x8x32xbf16, #tpu.memory_space<vmem>>, vector<8x2x8x32xbf16>
    %9 = arith.extf %8 : vector<8x2x8x32xbf16> to vector<8x2x8x32xf32>
    %10 = arith.addf %7, %9 : vector<8x2x8x32xf32>
    %c0_12 = arith.constant 0 : index
    %c4 = arith.constant 4 : index
    %c0_13 = arith.constant 0 : index
    %c0_14 = arith.constant 0 : index
    %11 = vector.load %arg1[%c0_12, %c4, %c0_13, %c0_14] : memref<8x8x8x32xbf16, #tpu.memory_space<vmem>>, vector<8x2x8x32xbf16>
    %12 = arith.extf %11 : vector<8x2x8x32xbf16> to vector<8x2x8x32xf32>
    %13 = arith.addf %10, %12 : vector<8x2x8x32xf32>
    %c0_15 = arith.constant 0 : index
    %c5 = arith.constant 5 : index
    %c0_16 = arith.constant 0 : index
    %c0_17 = arith.constant 0 : index
    %14 = vector.load %arg1[%c0_15, %c5, %c0_16, %c0_17] : memref<8x8x8x32xbf16, #tpu.memory_space<vmem>>, vector<8x2x8x32xbf16>
    %15 = arith.extf %14 : vector<8x2x8x32xbf16> to vector<8x2x8x32xf32>
    %16 = arith.addf %13, %15 : vector<8x2x8x32xf32>
    %c0_18 = arith.constant 0 : index
    %c6 = arith.constant 6 : index
    %c0_19 = arith.constant 0 : index
    %c0_20 = arith.constant 0 : index
    %17 = vector.load %arg1[%c0_18, %c6, %c0_19, %c0_20] : memref<8x8x8x32xbf16, #tpu.memory_space<vmem>>, vector<8x2x8x32xbf16>
    %18 = arith.extf %17 : vector<8x2x8x32xbf16> to vector<8x2x8x32xf32>
    %19 = arith.addf %16, %18 : vector<8x2x8x32xf32>
    %20 = vector.extract_strided_slice %19 {offsets = [0, 0, 0, 0], sizes = [8, 2, 2, 32], strides = [1, 1, 1, 1]} : vector<8x2x8x32xf32> to vector<8x2x2x32xf32>
    %21 = vector.extract_strided_slice %19 {offsets = [0, 0, 1, 0], sizes = [8, 2, 2, 32], strides = [1, 1, 1, 1]} : vector<8x2x8x32xf32> to vector<8x2x2x32xf32>
    %22 = arith.addf %20, %21 : vector<8x2x2x32xf32>
    %23 = vector.extract_strided_slice %19 {offsets = [0, 0, 2, 0], sizes = [8, 2, 2, 32], strides = [1, 1, 1, 1]} : vector<8x2x8x32xf32> to vector<8x2x2x32xf32>
    %24 = arith.addf %22, %23 : vector<8x2x2x32xf32>
    %25 = vector.extract_strided_slice %19 {offsets = [0, 0, 3, 0], sizes = [8, 2, 2, 32], strides = [1, 1, 1, 1]} : vector<8x2x8x32xf32> to vector<8x2x2x32xf32>
    %26 = arith.addf %24, %25 : vector<8x2x2x32xf32>
    %27 = vector.extract_strided_slice %19 {offsets = [0, 0, 4, 0], sizes = [8, 2, 2, 32], strides = [1, 1, 1, 1]} : vector<8x2x8x32xf32> to vector<8x2x2x32xf32>
    %28 = arith.addf %26, %27 : vector<8x2x2x32xf32>
    %29 = vector.extract_strided_slice %19 {offsets = [0, 0, 5, 0], sizes = [8, 2, 2, 32], strides = [1, 1, 1, 1]} : vector<8x2x8x32xf32> to vector<8x2x2x32xf32>
    %30 = arith.addf %28, %29 : vector<8x2x2x32xf32>
    %31 = vector.extract_strided_slice %19 {offsets = [0, 0, 6, 0], sizes = [8, 2, 2, 32], strides = [1, 1, 1, 1]} : vector<8x2x8x32xf32> to vector<8x2x2x32xf32>
    %32 = arith.addf %30, %31 : vector<8x2x2x32xf32>
    %cst = arith.constant 0.0204081628 : f32
    %33 = vector.broadcast %cst : f32 to vector<8x2x2x32xf32>
    %34 = arith.mulf %32, %33 : vector<8x2x2x32xf32>
    %35 = vector.shape_cast %34 : vector<8x2x2x32xf32> to vector<32x32xf32>
    %36 = arith.truncf %35 : vector<32x32xf32> to vector<32x32xbf16>
    %c0_21 = arith.constant 0 : index
    %c0_22 = arith.constant 0 : index
    %37 = vector.load %arg2[%c0_21, %c0_22] : memref<32x128xbf16, #tpu.memory_space<vmem>>, vector<32x128xbf16>
    %cst_23 = arith.constant dense<0.000000e+00> : vector<32x128xf32>
    %38 = tpu.matmul %36, %37, %cst_23 {dimension_numbers = #tpu.dot_dimension_numbers<[1], [0], [0], [1], [0, 0, 1, 1], [], []>} : vector<32x32xbf16>, vector<32x128xbf16>, vector<32x128xf32> -> vector<32x128xf32>
    %39 = vector.shape_cast %38 : vector<32x128xf32> to vector<8x4x128xf32>
    %cst_24 = arith.constant dense<0.000000e+00> : vector<8x128xf32>
    %40 = vector.multi_reduction <add>, %39, %cst_24 [1] : vector<8x4x128xf32> to vector<8x128xf32>
    %cst_25 = arith.constant 4.000000e+00 : f32
    %41 = vector.broadcast %cst_25 : f32 to vector<8x128xf32>
    %42 = arith.divf %40, %41 : vector<8x128xf32>
    %cst_26 = arith.constant dense<0xFF800000> : vector<8x128xf32>
    %43 = vector.multi_reduction <maximumf>, %39, %cst_26 [1] : vector<8x4x128xf32> to vector<8x128xf32>
    %44 = arith.addf %42, %43 : vector<8x128xf32>
    %cst_27 = arith.constant 5.000000e-01 : f32
    %45 = vector.broadcast %cst_27 : f32 to vector<8x128xf32>
    %46 = arith.mulf %45, %44 : vector<8x128xf32>
    %c0_28 = arith.constant 0 : index
    %c0_29 = arith.constant 0 : index
    %47 = vector.load %arg3[%c0_28, %c0_29] : memref<1x128xf32, #tpu.memory_space<vmem>>, vector<1x128xf32>
    %48 = vector.broadcast %47 : vector<1x128xf32> to vector<8x128xf32>
    %49 = arith.addf %46, %48 : vector<8x128xf32>
    %c0_30 = arith.constant 0 : index
    %c0_31 = arith.constant 0 : index
    %50 = vector.load %arg4[%c0_30, %c0_31] : memref<8x128xf32, #tpu.memory_space<vmem>>, vector<8x128xf32>
    tpu.vector_store %arg4[%c0_30, %c0_31], %49 {strides = array<i32>} : memref<8x128xf32, #tpu.memory_space<vmem>>, vector<8x128xf32>,
    return
  }
  func.func @transform_0(%arg0: i32) -> (i32, i32, i32, i32) {
    %c0_i32 = arith.constant 0 : i32
    %c0_i32_0 = arith.constant 0 : i32
    %c0_i32_1 = arith.constant 0 : i32
    %c0_i32_2 = arith.constant 0 : i32
    return %arg0, %c0_i32, %c0_i32_0, %c0_i32_1 : i32, i32, i32, i32
  }
  func.func @transform_1(%arg0: i32) -> (i32, i32) {
    %c0_i32 = arith.constant 0 : i32
    %c0_i32_0 = arith.constant 0 : i32
    %c0_i32_1 = arith.constant 0 : i32
    return %c0_i32, %c0_i32_0 : i32, i32
  }
  func.func @transform_2(%arg0: i32) -> (i32, i32) {
    %c0_i32 = arith.constant 0 : i32
    %c0_i32_0 = arith.constant 0 : i32
    %c0_i32_1 = arith.constant 0 : i32
    return %c0_i32, %c0_i32_0 : i32, i32
  }
  func.func @transform_3(%arg0: i32) -> (i32, i32) {
    %c0_i32 = arith.constant 0 : i32
    %c0_i32_0 = arith.constant 0 : i32
    return %arg0, %c0_i32 : i32, i32
  }
}

module attributes {stable_mosaic.version = 11 : i64} {
  func.func @_ttp_kernel(%arg0: i32, %arg1: memref<8x8x8x32xbf16, #tpu.memory_space<vmem>>, %arg2: memref<32x128xbf16, #tpu.memory_space<vmem>>, %arg3: memref<1x128xf32, #tpu.memory_space<vmem>>, %arg4: memref<8x128xf32, #tpu.memory_space<vmem>>) attributes {dimension_semantics = [#tpu.dimension_semantics<parallel>], iteration_bounds = array<i64: 2>, scalar_prefetch = 0 : i64, scratch_operands = 0 : i64, tpu.core_type = #tpu.core_type<tc>, window_params = [{transform_indices = @transform_0, window_bounds = array<i64: 8, 8, 8, 32>}, {pipeline_mode = #tpu.pipeline_mode<synchronous>, transform_indices = @transform_1, window_bounds = array<i64: 32, 128>}, {pipeline_mode = #tpu.pipeline_mode<synchronous>, transform_indices = @transform_2, window_bounds = array<i64: 1, 128>}, {transform_indices = @transform_3, window_bounds = array<i64: 8, 128>}]} {
    %c0 = arith.constant 0 : index
    %c0_0 = arith.constant 0 : index
    %c0_1 = arith.constant 0 : index
    %c0_2 = arith.constant 0 : index
    %0 = vector.load %arg1[%c0, %c0_0, %c0_1, %c0_2] : memref<8x8x8x32xbf16, #tpu.memory_space<vmem>>, vector<8x2x8x32xbf16>
    %1 = arith.extf %0 : vector<8x2x8x32xbf16> to vector<8x2x8x32xf32>
    %c0_3 = arith.constant 0 : index
    %c1 = arith.constant 1 : index
    %c0_4 = arith.constant 0 : index
    %c0_5 = arith.constant 0 : index
    %2 = vector.load %arg1[%c0_3, %c1, %c0_4, %c0_5] : memref<8x8x8x32xbf16, #tpu.memory_space<vmem>>, vector<8x2x8x32xbf16>
    %3 = arith.extf %2 : vector<8x2x8x32xbf16> to vector<8x2x8x32xf32>
    %4 = arith.addf %1, %3 : vector<8x2x8x32xf32>
    %c0_6 = arith.constant 0 : index
    %c2 = arith.constant 2 : index
    %c0_7 = arith.constant 0 : index
    %c0_8 = arith.constant 0 : index
    %5 = vector.load %arg1[%c0_6, %c2, %c0_7, %c0_8] : memref<8x8x8x32xbf16, #tpu.memory_space<vmem>>, vector<8x2x8x32xbf16>
    %6 = arith.extf %5 : vector<8x2x8x32xbf16> to vector<8x2x8x32xf32>
    %7 = arith.addf %4, %6 : vector<8x2x8x32xf32>
    %c0_9 = arith.constant 0 : index
    %c3 = arith.constant 3 : index
    %c0_10 = arith.constant 0 : index
    %c0_11 = arith.constant 0 : index
    %8 = vector.load %arg1[%c0_9, %c3, %c0_10, %c0_11] : memref<8x8x8x32xbf16, #tpu.memory_space<vmem>>, vector<8x2x8x32xbf16>
    %9 = arith.extf %8 : vector<8x2x8x32xbf16> to vector<8x2x8x32xf32>
    %10 = arith.addf %7, %9 : vector<8x2x8x32xf32>
    %c0_12 = arith.constant 0 : index
    %c4 = arith.constant 4 : index
    %c0_13 = arith.constant 0 : index
    %c0_14 = arith.constant 0 : index
    %11 = vector.load %arg1[%c0_12, %c4, %c0_13, %c0_14] : memref<8x8x8x32xbf16, #tpu.memory_space<vmem>>, vector<8x2x8x32xbf16>
    %12 = arith.extf %11 : vector<8x2x8x32xbf16> to vector<8x2x8x32xf32>
    %13 = arith.addf %10, %12 : vector<8x2x8x32xf32>
    %c0_15 = arith.constant 0 : index
    %c5 = arith.constant 5 : index
    %c0_16 = arith.constant 0 : index
    %c0_17 = arith.constant 0 : index
    %14 = vector.load %arg1[%c0_15, %c5, %c0_16, %c0_17] : memref<8x8x8x32xbf16, #tpu.memory_space<vmem>>, vector<8x2x8x32xbf16>
    %15 = arith.extf %14 : vector<8x2x8x32xbf16> to vector<8x2x8x32xf32>
    %16 = arith.addf %13, %15 : vector<8x2x8x32xf32>
    %c0_18 = arith.constant 0 : index
    %c6 = arith.constant 6 : index
    %c0_19 = arith.constant 0 : index
    %c0_20 = arith.constant 0 : index
    %17 = vector.load %arg1[%c0_18, %c6, %c0_19, %c0_20] : memref<8x8x8x32xbf16, #tpu.memory_space<vmem>>, vector<8x2x8x32xbf16>
    %18 = arith.extf %17 : vector<8x2x8x32xbf16> to vector<8x2x8x32xf32>
    %19 = arith.addf %16, %18 : vector<8x2x8x32xf32>
    %20 = vector.extract_strided_slice %19 {offsets = [0, 0, 0, 0], sizes = [8, 2, 2, 32], strides = [1, 1, 1, 1]} : vector<8x2x8x32xf32> to vector<8x2x2x32xf32>
    %21 = vector.extract_strided_slice %19 {offsets = [0, 0, 1, 0], sizes = [8, 2, 2, 32], strides = [1, 1, 1, 1]} : vector<8x2x8x32xf32> to vector<8x2x2x32xf32>
    %22 = arith.addf %20, %21 : vector<8x2x2x32xf32>
    %23 = vector.extract_strided_slice %19 {offsets = [0, 0, 2, 0], sizes = [8, 2, 2, 32], strides = [1, 1, 1, 1]} : vector<8x2x8x32xf32> to vector<8x2x2x32xf32>
    %24 = arith.addf %22, %23 : vector<8x2x2x32xf32>
    %25 = vector.extract_strided_slice %19 {offsets = [0, 0, 3, 0], sizes = [8, 2, 2, 32], strides = [1, 1, 1, 1]} : vector<8x2x8x32xf32> to vector<8x2x2x32xf32>
    %26 = arith.addf %24, %25 : vector<8x2x2x32xf32>
    %27 = vector.extract_strided_slice %19 {offsets = [0, 0, 4, 0], sizes = [8, 2, 2, 32], strides = [1, 1, 1, 1]} : vector<8x2x8x32xf32> to vector<8x2x2x32xf32>
    %28 = arith.addf %26, %27 : vector<8x2x2x32xf32>
    %29 = vector.extract_strided_slice %19 {offsets = [0, 0, 5, 0], sizes = [8, 2, 2, 32], strides = [1, 1, 1, 1]} : vector<8x2x8x32xf32> to vector<8x2x2x32xf32>
    %30 = arith.addf %28, %29 : vector<8x2x2x32xf32>
    %31 = vector.extract_strided_slice %19 {offsets = [0, 0, 6, 0], sizes = [8, 2, 2, 32], strides = [1, 1, 1, 1]} : vector<8x2x8x32xf32> to vector<8x2x2x32xf32>
    %32 = arith.addf %30, %31 : vector<8x2x2x32xf32>
    %cst = arith.constant 0.0204081628 : f32
    %33 = vector.broadcast %cst : f32 to vector<8x2x2x32xf32>
    %34 = arith.mulf %32, %33 : vector<8x2x2x32xf32>
    %35 = vector.shape_cast %34 : vector<8x2x2x32xf32> to vector<32x32xf32>
    %36 = arith.truncf %35 : vector<32x32xf32> to vector<32x32xbf16>
    %c0_21 = arith.constant 0 : index
    %c0_22 = arith.constant 0 : index
    %37 = vector.load %arg2[%c0_21, %c0_22] : memref<32x128xbf16, #tpu.memory_space<vmem>>, vector<32x128xbf16>
    %cst_23 = arith.constant dense<0.000000e+00> : vector<32x128xf32>
    %38 = tpu.matmul %36, %37, %cst_23 {dimension_numbers = #tpu.dot_dimension_numbers<[1], [0], [0], [1], [0, 0, 1, 1], [], []>} : vector<32x32xbf16>, vector<32x128xbf16>, vector<32x128xf32> -> vector<32x128xf32>
    %39 = vector.shape_cast %38 : vector<32x128xf32> to vector<8x4x128xf32>
    %cst_24 = arith.constant dense<0.000000e+00> : vector<8x128xf32>
    %40 = vector.multi_reduction <add>, %39, %cst_24 [1] : vector<8x4x128xf32> to vector<8x128xf32>
    %cst_25 = arith.constant 4.000000e+00 : f32
    %41 = vector.broadcast %cst_25 : f32 to vector<8x128xf32>
    %42 = arith.divf %40, %41 : vector<8x128xf32>
    %cst_26 = arith.constant dense<0xFF800000> : vector<8x128xf32>
    %43 = vector.multi_reduction <maximumf>, %39, %cst_26 [1] : vector<8x4x128xf32> to vector<8x128xf32>
    %44 = arith.addf %42, %43 : vector<8x128xf32>
    %cst_27 = arith.constant 5.000000e-01 : f32
    %45 = vector.broadcast %cst_27 : f32 to vector<8x128xf32>
    %46 = arith.mulf %45, %44 : vector<8x128xf32>
    %c0_28 = arith.constant 0 : index
    %c0_29 = arith.constant 0 : index
    %47 = vector.load %arg3[%c0_28, %c0_29] : memref<1x128xf32, #tpu.memory_space<vmem>>, vector<1x128xf32>
    %48 = vector.broadcast %47 : vector<1x128xf32> to vector<8x128xf32>
    %49 = arith.addf %46, %48 : vector<8x128xf32>
    %c0_30 = arith.constant 0 : index
    %c0_31 = arith.constant 0 : index
    %50 = vector.load %arg4[%c0_30, %c0_31] : memref<8x128xf32, #tpu.memory_space<vmem>>, vector<8x128xf32>
    tpu.vector_store %arg4[%c0_30, %c0_31], %49 {strides = array<i32>} : memref<8x128xf32, #tpu.memory_space<vmem>>, vector<8x128xf32>,
    return
  }
  func.func @transform_0(%arg0: i32) -> (i32, i32, i32, i32) {
    %c0_i32 = arith.constant 0 : i32
    %c0_i32_0 = arith.constant 0 : i32
    %c0_i32_1 = arith.constant 0 : i32
    %c0_i32_2 = arith.constant 0 : i32
    return %arg0, %c0_i32, %c0_i32_0, %c0_i32_1 : i32, i32, i32, i32
  }
  func.func @transform_1(%arg0: i32) -> (i32, i32) {
    %c0_i32 = arith.constant 0 : i32
    %c0_i32_0 = arith.constant 0 : i32
    %c0_i32_1 = arith.constant 0 : i32
    return %c0_i32, %c0_i32_0 : i32, i32
  }
  func.func @transform_2(%arg0: i32) -> (i32, i32) {
    %c0_i32 = arith.constant 0 : i32
    %c0_i32_0 = arith.constant 0 : i32
    %c0_i32_1 = arith.constant 0 : i32
    return %c0_i32, %c0_i32_0 : i32, i32
  }
  func.func @transform_3(%arg0: i32) -> (i32, i32) {
    %c0_i32 = arith.constant 0 : i32
    %c0_i32_0 = arith.constant 0 : i32
    return %arg0, %c0_i32 : i32, i32
  }
}

</mosaic_0001>

<llo_original>
// kernel: tpu_custom_call.1
$region0: #{tpu_custom_call.1}
  #allocation0 [shape = 'u32[]', space=smem, size = 0x4, offset = 0x4, fixed_abs, tag = 'smem constant byte address 0x4 - core index']
  #allocation1 [shape = 'u32[72,128]{1,0:T(1,128)}', space=vmem, size = 0x9000, scoped, tag = 'internal scratch']
  %s0 = inlined_call_operand.hbm [shape: bf16[10,8,8,32], index: 0, kind: input, shape index: {}]
  %s1 = inlined_call_operand.hbm [shape: bf16[32,128], index: 1, kind: input, shape index: {}]
  %s2 = inlined_call_operand.vmem [shape: f32[1,128], index: 2, kind: input, shape index: {}]
  %s3 = inlined_call_operand.hbm [shape: f32[10,128], index: 3, kind: output, shape index: {}]
  %s4 = sld [smem:[#allocation0]]
  $region53: #{tpu_custom_call.1} parent=0
    _
  %s6 = ssub.s32 1, %s4
  %s7 = scalar_select 0, %s6, %s4
  $region1: #{tpu_custom_call.1} parent=0
    #allocation2 [shape = 'u8[262144]{0}', space=vmem, size = 0x40000, scoped, tag = 'input window, operand 0']
    #allocation3 [shape = 's32[2]{0}', space=sflag, size = 0x8, scoped, tag = 'scoped memory for tpu_custom_call.1']
    #allocation4 [shape = 's32[2]{0}', space=sflag, size = 0x8, scoped, tag = 'scoped memory for tpu_custom_call.1']
    #allocation5 [shape = 'u8[8192]{0}', space=vmem, size = 0x2000, scoped, tag = 'input window, operand 1, single buffered']
    #allocation6 [shape = 's32[1]{0}', space=sflag, size = 0x4, scoped, tag = 'scoped memory for tpu_custom_call.1']
    #allocation7 [shape = 'u8[8192]{0}', space=vmem, size = 0x2000, scoped, tag = 'output window, operand 0']
    %8 = vsyncpa [#allocation3], 0
    %s9 = scalar_lea.sflag [#allocation3], 1
    %10 = vsyncpa %s9, 0
    %11 = vsyncpa [#allocation6], 0
    %12 = vsyncpa [#allocation4], 0
    %s13 = scalar_lea.sflag [#allocation4], 1
    %14 = vsyncpa %s13, 0
    loop: start=0, step=1, limit=4
    $region2: #{tpu_custom_call.1} parent=1 // loop_pre_header
      _
    $region3: #{tpu_custom_call.1} parent=1 // loop_header
      %s16 = sphi 0, %s20
      %p17 = scmp.ge.s32.totalorder %s16, 4
      %s26 = sphi 0, %s28
      %s29 = sphi 0, %s26
      %s30 = sphi 0, %s29
      %s46 = sphi 0, %s30
      %s50 = sphi 0, %s50
      %s52 = sphi 0, %s50
      %s53 = sphi 0, %s52
      %s67 = sphi 0, %s53
      %s71 = sphi 0, %s71
      %s73 = sphi 0, %s71
      %s74 = sphi 0, %s73
      %s88 = sphi 0, %s74
      %s94 = sphi 0, %s96
      %s97 = sphi 0, %s94
      %s98 = sphi 0, %s97
      %s114 = sphi 0, %s98
    $region4: #{tpu_custom_call.1} parent=1 // loop_header_branch
      %19 = sbr.rel (%p17) target = $region8
    $region5: #{tpu_custom_call.1} parent=1 // loop_body
      %s21 = ssub.s32 %s16, 1
      %s22 = ssub.s32 %s16, 2
      %s23 = sadd.s32 %s16, 1
      %s24 = ssub.s32 %s16, %s23
      %p25 = scmp.eq.s32.totalorder %s24, 0
      %s27 = sadd.s32 %s26, 1
      %s28 = scalar_select %p25, %s26, %s27
      %p31 = pneg %p25
      %p32 = scmp.eq.s32.totalorder %s16, 1
      %p33 = por %p31, %p32
      %p34 = scmp.ne.s32.totalorder %s26, %s29
      %p35 = scmp.eq.s32.totalorder %s16, 0
      %p36 = por %p34, %p35
      %p37 = scmp.ne.s32.totalorder %s26, %s29
      %p38 = scmp.eq.s32.totalorder %s21, 1
      %p39 = por %p37, %p38
      %p40 = scmp.ne.s32.totalorder %s29, %s30
      %p41 = scmp.eq.s32.totalorder %s21, 0
      %p42 = por %p40, %p41
      %p43 = scmp.ne.s32.totalorder %s29, %s30
      %p44 = scmp.eq.s32.totalorder %s22, 1
      %p45 = por %p43, %p44
      %p47 = scmp.ne.s32.totalorder %s30, %s46
      %p48 = scmp.eq.s32.totalorder %s22, 0
      %p49 = por %p47, %p48
      %s51 = sadd.s32 %s50, 1
      %p54 = scmp.eq.s32.totalorder %s16, 1
      %p55 = scmp.ne.s32.totalorder %s50, %s52
      %p56 = scmp.eq.s32.totalorder %s16, 0
      %p57 = por %p55, %p56
      %p58 = scmp.ne.s32.totalorder %s50, %s52
      %p59 = scmp.eq.s32.totalorder %s21, 1
      %p60 = por %p58, %p59
      %p61 = scmp.ne.s32.totalorder %s52, %s53
      %p62 = scmp.eq.s32.totalorder %s21, 0
      %p63 = por %p61, %p62
      %p64 = scmp.ne.s32.totalorder %s52, %s53
      %p65 = scmp.eq.s32.totalorder %s22, 1
      %p66 = por %p64, %p65
      %p68 = scmp.ne.s32.totalorder %s53, %s67
      %p69 = scmp.eq.s32.totalorder %s22, 0
      %p70 = por %p68, %p69
      %s72 = sadd.s32 %s71, 1
      %p75 = scmp.eq.s32.totalorder %s16, 1
      %p76 = scmp.ne.s32.totalorder %s71, %s73
      %p77 = scmp.eq.s32.totalorder %s16, 0
      %p78 = por %p76, %p77
      %p79 = scmp.ne.s32.totalorder %s71, %s73
      %p80 = scmp.eq.s32.totalorder %s21, 1
      %p81 = por %p79, %p80
      %p82 = scmp.ne.s32.totalorder %s73, %s74
      %p83 = scmp.eq.s32.totalorder %s21, 0
      %p84 = por %p82, %p83
      %p85 = scmp.ne.s32.totalorder %s73, %s74
      %p86 = scmp.eq.s32.totalorder %s22, 1
      %p87 = por %p85, %p86
      %p89 = scmp.ne.s32.totalorder %s74, %s88
      %p90 = scmp.eq.s32.totalorder %s22, 0
      %p91 = por %p89, %p90
      %s92 = ssub.s32 %s16, %s23
      %p93 = scmp.eq.s32.totalorder %s92, 0
      %s95 = sadd.s32 %s94, 1
      %s96 = scalar_select %p93, %s94, %s95
      %p99 = pneg %p93
      %p100 = scmp.eq.s32.totalorder %s16, 1
      %p101 = por %p99, %p100
      %p102 = scmp.ne.s32.totalorder %s94, %s97
      %p103 = scmp.eq.s32.totalorder %s16, 0
      %p104 = por %p102, %p103
      %p105 = scmp.ne.s32.totalorder %s94, %s97
      %p106 = scmp.eq.s32.totalorder %s21, 1
      %p107 = por %p105, %p106
      %p108 = scmp.ne.s32.totalorder %s97, %s98
      %p109 = scmp.eq.s32.totalorder %s21, 0
      %p110 = por %p108, %p109
      %p111 = scmp.ne.s32.totalorder %s97, %s98
      %p112 = scmp.eq.s32.totalorder %s22, 1
      %p113 = por %p111, %p112
      %p115 = scmp.ne.s32.totalorder %s98, %s114
      %p116 = scmp.eq.s32.totalorder %s22, 0
      %p117 = por %p115, %p116
      %p118 = scmp.le.s32.totalorder 1, %s16
      %p119 = scmp.lt.s32.totalorder %s16, 3
      %p120 = pnand %p118, %p119
      %p121 = pneg %p120
      // Predicated region
      $region9: #{tpu_custom_call.1} parent=5 // pred_check
        _
      $region10: #{tpu_custom_call.1} parent=5 // pred_check_branch
        %123 = sbr.rel (%p120) target = $region12
      $region11: #{tpu_custom_call.1} parent=5 // pred_region
        %s124 = ssub.s32 %s16, 1
        // Predicated region
        $region13: #{tpu_custom_call.1} parent=11 // pred_check
          %p125 = pneg %p63
        $region14: #{tpu_custom_call.1} parent=11 // pred_check_branch
          %127 = sbr.rel (%p125) target = $region16
        $region15: #{tpu_custom_call.1} parent=11 // pred_region
          %129 = vsyncadd [#allocation6], 0
          %s130 = sshll.u32 %s1, 4
          %s131 = int_to_ptr.hbm [resolvable:$true] %s130
          %s132 = sshll.u32 [#allocation5], 4
          %s133 = int_to_ptr.vmem [resolvable:$true] %s132
          %138 = dma.hbm_to_vmem [thread:$0]  %s131, 256, %s133, [#allocation6], 64, 64, 4
        $region16: #{tpu_custom_call.1} parent=11 // pred_fallthru
          _
        // Predicated region
        $region17: #{tpu_custom_call.1} parent=11 // pred_check
          %p139 = pneg %p84
        $region18: #{tpu_custom_call.1} parent=11 // pred_check_branch
          %141 = sbr.rel (%p139) target = $region20
        $region19: #{tpu_custom_call.1} parent=11 // pred_region
          _
        $region20: #{tpu_custom_call.1} parent=11 // pred_fallthru
          _
      $region12: #{tpu_custom_call.1} parent=5 // pred_fallthru
        _
      %p142 = scmp.lt.s32.totalorder %s16, 2
      // Predicated region
      $region21: #{tpu_custom_call.1} parent=5 // pred_check
        %p143 = pneg %p142
      $region22: #{tpu_custom_call.1} parent=5 // pred_check_branch
        %145 = sbr.rel (%p143) target = $region24
      $region23: #{tpu_custom_call.1} parent=5 // pred_region
        // Predicated region
        $region25: #{tpu_custom_call.1} parent=23 // pred_check
          %p146 = pneg %p36
        $region26: #{tpu_custom_call.1} parent=23 // pred_check_branch
          %148 = sbr.rel (%p146) target = $region28
        $region27: #{tpu_custom_call.1} parent=23 // pred_region
          %s149 = sand.u32 %s26, 1
          %s150 = scalar_lea.sflag [#allocation3], %s149
          %s151 = sand.u32 %s26, 1
          %s152 = smul.addr %s151, 256
          %s153 = scalar_lea.vmem [#allocation2], %s152
          %s154 = smul.u32 8, %s16
          %s155 = ssub.s32 10, %s154
          %p156 = scmp.lt.s32.totalorder %s155, 8
          %s157 = scalar_select %p156, %s155, 8
          %s158 = smul.u32 4, %s157
          %s159 = smul.u32 %s158, 8
          %s160 = ssub.s32 256, %s159
          %s161 = sshll.u32 %s160, 4
          %162 = vsyncadd %s150, %s161
          %p163 = scmp.ne.s32.totalorder 0, %s159
          %s164 = smul.addr %s154, 8
          %s165 = smul.addr %s164, 4
          %s166 = scalar_lea.hbm %s0, %s165
          %s167 = smul.u32 %s157, 8
          %s168 = smul.u32 4, %s167
          %s169 = sshll.u32 %s166, 4
          %s170 = int_to_ptr.hbm [resolvable:$true] %s169
          %s171 = sshll.u32 %s153, 4
          %s172 = int_to_ptr.vmem [resolvable:$true] %s171
          %s173 = sshll.u32 %s168, 4
          %177 = dma.hbm_to_vmem [thread:$0]  (%p163), %s170, %s173, %s172, %s150, 64, 64, 4
        $region28: #{tpu_custom_call.1} parent=23 // pred_fallthru
          _
      $region24: #{tpu_custom_call.1} parent=5 // pred_fallthru
        _
      %p178 = scmp.le.s32.totalorder 1, %s16
      %p179 = scmp.lt.s32.totalorder %s16, 3
      %p180 = pnand %p178, %p179
      %p181 = pneg %p180
      // Predicated region
      $region29: #{tpu_custom_call.1} parent=5 // pred_check
        _
      $region30: #{tpu_custom_call.1} parent=5 // pred_check_branch
        %183 = sbr.rel (%p180) target = $region32
      $region31: #{tpu_custom_call.1} parent=5 // pred_region
        %s184 = ssub.s32 %s16, 1
        %s185 = sand.u32 %s29, 1
        %s186 = scalar_lea.sflag [#allocation3], %s185
        %s187 = sand.u32 %s29, 1
        %s188 = smul.addr %s187, 256
        %s189 = scalar_lea.vmem [#allocation2], %s188
        // Predicated region
        $region33: #{tpu_custom_call.1} parent=31 // pred_check
          %p190 = pneg %p42
        $region34: #{tpu_custom_call.1} parent=31 // pred_check_branch
          %192 = sbr.rel (%p190) target = $region36
        $region35: #{tpu_custom_call.1} parent=31 // pred_region
          %194 = dma.done %s186, 4096
        $region36: #{tpu_custom_call.1} parent=31 // pred_fallthru
          _
        // Predicated region
        $region37: #{tpu_custom_call.1} parent=31 // pred_check
          %p195 = pneg %p63
        $region38: #{tpu_custom_call.1} parent=31 // pred_check_branch
          %197 = sbr.rel (%p195) target = $region40
        $region39: #{tpu_custom_call.1} parent=31 // pred_region
          %199 = dma.done [#allocation6], 256
        $region40: #{tpu_custom_call.1} parent=31 // pred_fallthru
          _
        %s200 = sand.u32 %s29, 1
        %s201 = scalar_lea.sflag [#allocation3], %s200
        %s202 = sand.u32 %s29, 1
        %s203 = smul.addr %s202, 256
        %s204 = scalar_lea.vmem [#allocation2], %s203
        %p205 = pneg %p42
        %p206 = pneg %p39
        %p207 = pneg %p63
        %p208 = pneg %p60
        %p209 = pneg %p84
        %p210 = pneg %p81
        %p211 = pneg %p110
        %p212 = pneg %p107
        %s213 = sand.u32 %s97, 1
        %s214 = scalar_lea.sflag [#allocation4], %s213
        %s215 = sand.u32 %s97, 1
        %s216 = smul.addr %s215, 8
        %s217 = scalar_lea.vmem [#allocation7], %s216
        %s218 = smul.u32 8, %s21
        %s219 = ssub.s32 10, %s218
        %p220 = scmp.lt.s32.totalorder %s219, 8
        %s221 = scalar_select %p220, %s219, 8
        %s222 = smul.u32 4, %s221
        %s223 = smul.u32 %s222, 8
        %v225 = vld [vmem:[%s189] sm:$0xf]
        %v226 = vld [vmem:[%s189 + $0x4] sm:$0xf]
        %v227 = vld [vmem:[%s189 + $0x20] sm:$0xf]
        %v228 = vld [vmem:[%s189 + $0x24] sm:$0xf]
        %v229 = vld [vmem:[%s189 + $0x40] sm:$0xf]
        %v230 = vld [vmem:[%s189 + $0x44] sm:$0xf]
        %v231 = vld [vmem:[%s189 + $0x60] sm:$0xf]
        %v232 = vld [vmem:[%s189 + $0x64] sm:$0xf]
        %v233 = vld [vmem:[%s189 + $0x80] sm:$0xf]
        %v234 = vld [vmem:[%s189 + $0x84] sm:$0xf]
        %v235 = vld [vmem:[%s189 + $0xa0] sm:$0xf]
        %v236 = vld [vmem:[%s189 + $0xa4] sm:$0xf]
        %v237 = vld [vmem:[%s189 + $0xc0] sm:$0xf]
        %v238 = vld [vmem:[%s189 + $0xc4] sm:$0xf]
        %v239 = vld [vmem:[%s189 + $0xe0] sm:$0xf]
        %v240 = vld [vmem:[%s189 + $0xe4] sm:$0xf]
        %v241 = vunpack.c.l.bf16 %v225
        %v242 = vunpack.c.l.bf16 %v226
        %v243 = vunpack.c.l.bf16 %v227
        %v244 = vunpack.c.l.bf16 %v228
        %v245 = vunpack.c.l.bf16 %v229
        %v246 = vunpack.c.l.bf16 %v230
        %v247 = vunpack.c.l.bf16 %v231
        %v248 = vunpack.c.l.bf16 %v232
        %v249 = vunpack.c.l.bf16 %v233
        %v250 = vunpack.c.l.bf16 %v234
        %v251 = vunpack.c.l.bf16 %v235
        %v252 = vunpack.c.l.bf16 %v236
        %v253 = vunpack.c.l.bf16 %v237
        %v254 = vunpack.c.l.bf16 %v238
        %v255 = vunpack.c.l.bf16 %v239
        %v256 = vunpack.c.l.bf16 %v240
        %s257 = scalar_lea.vmem %s189, 4 [#allocation2]
        %v258 = vld [vmem:[%s257] sm:$0xf]
        %v259 = vld [vmem:[%s257 + $0x4] sm:$0xf]
        %v260 = vld [vmem:[%s257 + $0x20] sm:$0xf]
        %v261 = vld [vmem:[%s257 + $0x24] sm:$0xf]
        %v262 = vld [vmem:[%s257 + $0x40] sm:$0xf]
        %v263 = vld [vmem:[%s257 + $0x44] sm:$0xf]
        %v264 = vld [vmem:[%s257 + $0x60] sm:$0xf]
        %v265 = vld [vmem:[%s257 + $0x64] sm:$0xf]
        %v266 = vld [vmem:[%s257 + $0x80] sm:$0xf]
        %v267 = vld [vmem:[%s257 + $0x84] sm:$0xf]
        %v268 = vld [vmem:[%s257 + $0xa0] sm:$0xf]
        %v269 = vld [vmem:[%s257 + $0xa4] sm:$0xf]
        %v270 = vld [vmem:[%s257 + $0xc0] sm:$0xf]
        %v271 = vld [vmem:[%s257 + $0xc4] sm:$0xf]
        %v272 = vld [vmem:[%s257 + $0xe0] sm:$0xf]
        %v273 = vld [vmem:[%s257 + $0xe4] sm:$0xf]
        %v274 = vunpack.c.l.bf16 %v258
        %v275 = vunpack.c.l.bf16 %v259
        %v276 = vunpack.c.l.bf16 %v260
        %v277 = vunpack.c.l.bf16 %v261
        %v278 = vunpack.c.l.bf16 %v262
        %v279 = vunpack.c.l.bf16 %v263
        %v280 = vunpack.c.l.bf16 %v264
        %v281 = vunpack.c.l.bf16 %v265
        %v282 = vunpack.c.l.bf16 %v266
        %v283 = vunpack.c.l.bf16 %v267
        %v284 = vunpack.c.l.bf16 %v268
        %v285 = vunpack.c.l.bf16 %v269
        %v286 = vunpack.c.l.bf16 %v270
        %v287 = vunpack.c.l.bf16 %v271
        %v288 = vunpack.c.l.bf16 %v272
        %v289 = vunpack.c.l.bf16 %v273
        %v290 = vadd.f32 %v241, %v274
        %v291 = vadd.f32 %v242, %v275
        %v292 = vadd.f32 %v243, %v276
        %v293 = vadd.f32 %v244, %v277
        %v294 = vadd.f32 %v245, %v278
        %v295 = vadd.f32 %v246, %v279
        %v296 = vadd.f32 %v247, %v280
        %v297 = vadd.f32 %v248, %v281
        %v298 = vadd.f32 %v249, %v282
        %v299 = vadd.f32 %v250, %v283
        %v300 = vadd.f32 %v251, %v284
        %v301 = vadd.f32 %v252, %v285
        %v302 = vadd.f32 %v253, %v286
        %v303 = vadd.f32 %v254, %v287
        %v304 = vadd.f32 %v255, %v288
        %v305 = vadd.f32 %v256, %v289
        %s306 = scalar_lea.vmem %s189, 8 [#allocation2]
        %v307 = vld [vmem:[%s306] sm:$0xf]
        %v308 = vld [vmem:[%s306 + $0x4] sm:$0xf]
        %v309 = vld [vmem:[%s306 + $0x20] sm:$0xf]
        %v310 = vld [vmem:[%s306 + $0x24] sm:$0xf]
        %v311 = vld [vmem:[%s306 + $0x40] sm:$0xf]
        %v312 = vld [vmem:[%s306 + $0x44] sm:$0xf]
        %v313 = vld [vmem:[%s306 + $0x60] sm:$0xf]
        %v314 = vld [vmem:[%s306 + $0x64] sm:$0xf]
        %v315 = vld [vmem:[%s306 + $0x80] sm:$0xf]
        %v316 = vld [vmem:[%s306 + $0x84] sm:$0xf]
        %v317 = vld [vmem:[%s306 + $0xa0] sm:$0xf]
        %v318 = vld [vmem:[%s306 + $0xa4] sm:$0xf]
        %v319 = vld [vmem:[%s306 + $0xc0] sm:$0xf]
        %v320 = vld [vmem:[%s306 + $0xc4] sm:$0xf]
        %v321 = vld [vmem:[%s306 + $0xe0] sm:$0xf]
        %v322 = vld [vmem:[%s306 + $0xe4] sm:$0xf]
        %v323 = vunpack.c.l.bf16 %v307
        %v324 = vunpack.c.l.bf16 %v308
        %v325 = vunpack.c.l.bf16 %v309
        %v326 = vunpack.c.l.bf16 %v310
        %v327 = vunpack.c.l.bf16 %v311
        %v328 = vunpack.c.l.bf16 %v312
        %v329 = vunpack.c.l.bf16 %v313
        %v330 = vunpack.c.l.bf16 %v314
        %v331 = vunpack.c.l.bf16 %v315
        %v332 = vunpack.c.l.bf16 %v316
        %v333 = vunpack.c.l.bf16 %v317
        %v334 = vunpack.c.l.bf16 %v318
        %v335 = vunpack.c.l.bf16 %v319
        %v336 = vunpack.c.l.bf16 %v320
        %v337 = vunpack.c.l.bf16 %v321
        %v338 = vunpack.c.l.bf16 %v322
        %v339 = vadd.f32 %v290, %v323
        %v340 = vadd.f32 %v291, %v324
        %v341 = vadd.f32 %v292, %v325
        %v342 = vadd.f32 %v293, %v326
        %v343 = vadd.f32 %v294, %v327
        %v344 = vadd.f32 %v295, %v328
        %v345 = vadd.f32 %v296, %v329
        %v346 = vadd.f32 %v297, %v330
        %v347 = vadd.f32 %v298, %v331
        %v348 = vadd.f32 %v299, %v332
        %v349 = vadd.f32 %v300, %v333
        %v350 = vadd.f32 %v301, %v334
        %v351 = vadd.f32 %v302, %v335
        %v352 = vadd.f32 %v303, %v336
        %v353 = vadd.f32 %v304, %v337
        %v354 = vadd.f32 %v305, %v338
        %s355 = scalar_lea.vmem %s189, 12 [#allocation2]
        %v356 = vld [vmem:[%s355] sm:$0xf]
        %v357 = vld [vmem:[%s355 + $0x4] sm:$0xf]
        %v358 = vld [vmem:[%s355 + $0x20] sm:$0xf]
        %v359 = vld [vmem:[%s355 + $0x24] sm:$0xf]
        %v360 = vld [vmem:[%s355 + $0x40] sm:$0xf]
        %v361 = vld [vmem:[%s355 + $0x44] sm:$0xf]
        %v362 = vld [vmem:[%s355 + $0x60] sm:$0xf]
        %v363 = vld [vmem:[%s355 + $0x64] sm:$0xf]
        %v364 = vld [vmem:[%s355 + $0x80] sm:$0xf]
        %v365 = vld [vmem:[%s355 + $0x84] sm:$0xf]
        %v366 = vld [vmem:[%s355 + $0xa0] sm:$0xf]
        %v367 = vld [vmem:[%s355 + $0xa4] sm:$0xf]
        %v368 = vld [vmem:[%s355 + $0xc0] sm:$0xf]
        %v369 = vld [vmem:[%s355 + $0xc4] sm:$0xf]
        %v370 = vld [vmem:[%s355 + $0xe0] sm:$0xf]
        %v371 = vld [vmem:[%s355 + $0xe4] sm:$0xf]
        %v372 = vunpack.c.l.bf16 %v356
        %v373 = vunpack.c.l.bf16 %v357
        %v374 = vunpack.c.l.bf16 %v358
        %v375 = vunpack.c.l.bf16 %v359
        %v376 = vunpack.c.l.bf16 %v360
        %v377 = vunpack.c.l.bf16 %v361
        %v378 = vunpack.c.l.bf16 %v362
        %v379 = vunpack.c.l.bf16 %v363
        %v380 = vunpack.c.l.bf16 %v364
        %v381 = vunpack.c.l.bf16 %v365
        %v382 = vunpack.c.l.bf16 %v366
        %v383 = vunpack.c.l.bf16 %v367
        %v384 = vunpack.c.l.bf16 %v368
        %v385 = vunpack.c.l.bf16 %v369
        %v386 = vunpack.c.l.bf16 %v370
        %v387 = vunpack.c.l.bf16 %v371
        %v388 = vadd.f32 %v339, %v372
        %v389 = vadd.f32 %v340, %v373
        %v390 = vadd.f32 %v341, %v374
        %v391 = vadd.f32 %v342, %v375
        %v392 = vadd.f32 %v343, %v376
        %v393 = vadd.f32 %v344, %v377
        %v394 = vadd.f32 %v345, %v378
        %v395 = vadd.f32 %v346, %v379
        %v396 = vadd.f32 %v347, %v380
        %v397 = vadd.f32 %v348, %v381
        %v398 = vadd.f32 %v349, %v382
        %v399 = vadd.f32 %v350, %v383
        %v400 = vadd.f32 %v351, %v384
        %v401 = vadd.f32 %v352, %v385
        %v402 = vadd.f32 %v353, %v386
        %v403 = vadd.f32 %v354, %v387
        %s404 = scalar_lea.vmem %s189, 16 [#allocation2]
        %v405 = vld [vmem:[%s404] sm:$0xf]
        %v406 = vld [vmem:[%s404 + $0x4] sm:$0xf]
        %v407 = vld [vmem:[%s404 + $0x20] sm:$0xf]
        %v408 = vld [vmem:[%s404 + $0x24] sm:$0xf]
        %v409 = vld [vmem:[%s404 + $0x40] sm:$0xf]
        %v410 = vld [vmem:[%s404 + $0x44] sm:$0xf]
        %v411 = vld [vmem:[%s404 + $0x60] sm:$0xf]
        %v412 = vld [vmem:[%s404 + $0x64] sm:$0xf]
        %v413 = vld [vmem:[%s404 + $0x80] sm:$0xf]
        %v414 = vld [vmem:[%s404 + $0x84] sm:$0xf]
        %v415 = vld [vmem:[%s404 + $0xa0] sm:$0xf]
        %v416 = vld [vmem:[%s404 + $0xa4] sm:$0xf]
        %v417 = vld [vmem:[%s404 + $0xc0] sm:$0xf]
        %v418 = vld [vmem:[%s404 + $0xc4] sm:$0xf]
        %v419 = vld [vmem:[%s404 + $0xe0] sm:$0xf]
        %v420 = vld [vmem:[%s404 + $0xe4] sm:$0xf]
        %v421 = vunpack.c.l.bf16 %v405
        %v422 = vunpack.c.l.bf16 %v406
        %v423 = vunpack.c.l.bf16 %v407
        %v424 = vunpack.c.l.bf16 %v408
        %v425 = vunpack.c.l.bf16 %v409
        %v426 = vunpack.c.l.bf16 %v410
        %v427 = vunpack.c.l.bf16 %v411
        %v428 = vunpack.c.l.bf16 %v412
        %v429 = vunpack.c.l.bf16 %v413
        %v430 = vunpack.c.l.bf16 %v414
        %v431 = vunpack.c.l.bf16 %v415
        %v432 = vunpack.c.l.bf16 %v416
        %v433 = vunpack.c.l.bf16 %v417
        %v434 = vunpack.c.l.bf16 %v418
        %v435 = vunpack.c.l.bf16 %v419
        %v436 = vunpack.c.l.bf16 %v420
        %v437 = vadd.f32 %v388, %v421
        %v438 = vadd.f32 %v389, %v422
        %v439 = vadd.f32 %v390, %v423
        %v440 = vadd.f32 %v391, %v424
        %v441 = vadd.f32 %v392, %v425
        %v442 = vadd.f32 %v393, %v426
        %v443 = vadd.f32 %v394, %v427
        %v444 = vadd.f32 %v395, %v428
        %v445 = vadd.f32 %v396, %v429
        %v446 = vadd.f32 %v397, %v430
        %v447 = vadd.f32 %v398, %v431
        %v448 = vadd.f32 %v399, %v432
        %v449 = vadd.f32 %v400, %v433
        %v450 = vadd.f32 %v401, %v434
        %v451 = vadd.f32 %v402, %v435
        %v452 = vadd.f32 %v403, %v436
        %s453 = scalar_lea.vmem %s189, 20 [#allocation2]
        %v454 = vld [vmem:[%s453] sm:$0xf]
        %v455 = vld [vmem:[%s453 + $0x4] sm:$0xf]
        %v456 = vld [vmem:[%s453 + $0x20] sm:$0xf]
        %v457 = vld [vmem:[%s453 + $0x24] sm:$0xf]
        %v458 = vld [vmem:[%s453 + $0x40] sm:$0xf]
        %v459 = vld [vmem:[%s453 + $0x44] sm:$0xf]
        %v460 = vld [vmem:[%s453 + $0x60] sm:$0xf]
        %v461 = vld [vmem:[%s453 + $0x64] sm:$0xf]
        %v462 = vld [vmem:[%s453 + $0x80] sm:$0xf]
        %v463 = vld [vmem:[%s453 + $0x84] sm:$0xf]
        %v464 = vld [vmem:[%s453 + $0xa0] sm:$0xf]
        %v465 = vld [vmem:[%s453 + $0xa4] sm:$0xf]
        %v466 = vld [vmem:[%s453 + $0xc0] sm:$0xf]
        %v467 = vld [vmem:[%s453 + $0xc4] sm:$0xf]
        %v468 = vld [vmem:[%s453 + $0xe0] sm:$0xf]
        %v469 = vld [vmem:[%s453 + $0xe4] sm:$0xf]
        %v470 = vunpack.c.l.bf16 %v454
        %v471 = vunpack.c.l.bf16 %v455
        %v472 = vunpack.c.l.bf16 %v456
        %v473 = vunpack.c.l.bf16 %v457
        %v474 = vunpack.c.l.bf16 %v458
        %v475 = vunpack.c.l.bf16 %v459
        %v476 = vunpack.c.l.bf16 %v460
        %v477 = vunpack.c.l.bf16 %v461
        %v478 = vunpack.c.l.bf16 %v462
        %v479 = vunpack.c.l.bf16 %v463
        %v480 = vunpack.c.l.bf16 %v464
        %v481 = vunpack.c.l.bf16 %v465
        %v482 = vunpack.c.l.bf16 %v466
        %v483 = vunpack.c.l.bf16 %v467
        %v484 = vunpack.c.l.bf16 %v468
        %v485 = vunpack.c.l.bf16 %v469
        %v486 = vadd.f32 %v437, %v470
        %v487 = vadd.f32 %v438, %v471
        %v488 = vadd.f32 %v439, %v472
        %v489 = vadd.f32 %v440, %v473
        %v490 = vadd.f32 %v441, %v474
        %v491 = vadd.f32 %v442, %v475
        %v492 = vadd.f32 %v443, %v476
        %v493 = vadd.f32 %v444, %v477
        %v494 = vadd.f32 %v445, %v478
        %v495 = vadd.f32 %v446, %v479
        %v496 = vadd.f32 %v447, %v480
        %v497 = vadd.f32 %v448, %v481
        %v498 = vadd.f32 %v449, %v482
        %v499 = vadd.f32 %v450, %v483
        %v500 = vadd.f32 %v451, %v484
        %v501 = vadd.f32 %v452, %v485
        %s502 = scalar_lea.vmem %s189, 24 [#allocation2]
        %v503 = vld [vmem:[%s502] sm:$0xf]
        %v504 = vld [vmem:[%s502 + $0x4] sm:$0xf]
        %v505 = vld [vmem:[%s502 + $0x20] sm:$0xf]
        %v506 = vld [vmem:[%s502 + $0x24] sm:$0xf]
        %v507 = vld [vmem:[%s502 + $0x40] sm:$0xf]
        %v508 = vld [vmem:[%s502 + $0x44] sm:$0xf]
        %v509 = vld [vmem:[%s502 + $0x60] sm:$0xf]
        %v510 = vld [vmem:[%s502 + $0x64] sm:$0xf]
        %v511 = vld [vmem:[%s502 + $0x80] sm:$0xf]
        %v512 = vld [vmem:[%s502 + $0x84] sm:$0xf]
        %v513 = vld [vmem:[%s502 + $0xa0] sm:$0xf]
        %v514 = vld [vmem:[%s502 + $0xa4] sm:$0xf]
        %v515 = vld [vmem:[%s502 + $0xc0] sm:$0xf]
        %v516 = vld [vmem:[%s502 + $0xc4] sm:$0xf]
        %v517 = vld [vmem:[%s502 + $0xe0] sm:$0xf]
        %v518 = vld [vmem:[%s502 + $0xe4] sm:$0xf]
        %v519 = vunpack.c.l.bf16 %v503
        %v520 = vunpack.c.l.bf16 %v504
        %v521 = vunpack.c.l.bf16 %v505
        %v522 = vunpack.c.l.bf16 %v506
        %v523 = vunpack.c.l.bf16 %v507
        %v524 = vunpack.c.l.bf16 %v508
        %v525 = vunpack.c.l.bf16 %v509
        %v526 = vunpack.c.l.bf16 %v510
        %v527 = vunpack.c.l.bf16 %v511
        %v528 = vunpack.c.l.bf16 %v512
        %v529 = vunpack.c.l.bf16 %v513
        %v530 = vunpack.c.l.bf16 %v514
        %v531 = vunpack.c.l.bf16 %v515
        %v532 = vunpack.c.l.bf16 %v516
        %v533 = vunpack.c.l.bf16 %v517
        %v534 = vunpack.c.l.bf16 %v518
        %v535 = vadd.f32 %v486, %v519
        %v536 = vadd.f32 %v487, %v520
        %v537 = vadd.f32 %v488, %v521
        %v538 = vadd.f32 %v489, %v522
        %v539 = vadd.f32 %v490, %v523
        %v540 = vadd.f32 %v491, %v524
        %v541 = vadd.f32 %v492, %v525
        %v542 = vadd.f32 %v493, %v526
        %v543 = vadd.f32 %v494, %v527
        %v544 = vadd.f32 %v495, %v528
        %v545 = vadd.f32 %v496, %v529
        %v546 = vadd.f32 %v497, %v530
        %v547 = vadd.f32 %v498, %v531
        %v548 = vadd.f32 %v499, %v532
        %v549 = vadd.f32 %v500, %v533
        %v550 = vadd.f32 %v501, %v534
        %v567 = vrot.slane %v535, 1
        %v568 = vrot.slane %v536, 1
        %v569 = vrot.slane %v537, 1
        %v570 = vrot.slane %v538, 1
        %v571 = vrot.slane %v539, 1
        %v572 = vrot.slane %v540, 1
        %v573 = vrot.slane %v541, 1
        %v574 = vrot.slane %v542, 1
        %v575 = vrot.slane %v543, 1
        %v576 = vrot.slane %v544, 1
        %v577 = vrot.slane %v545, 1
        %v578 = vrot.slane %v546, 1
        %v579 = vrot.slane %v547, 1
        %v580 = vrot.slane %v548, 1
        %v581 = vrot.slane %v549, 1
        %v582 = vrot.slane %v550, 1
        %v599 = vadd.f32 %v535, %v567
        %v600 = vadd.f32 %v536, %v568
        %v601 = vadd.f32 %v537, %v569
        %v602 = vadd.f32 %v538, %v570
        %v603 = vadd.f32 %v539, %v571
        %v604 = vadd.f32 %v540, %v572
        %v605 = vadd.f32 %v541, %v573
        %v606 = vadd.f32 %v542, %v574
        %v607 = vadd.f32 %v543, %v575
        %v608 = vadd.f32 %v544, %v576
        %v609 = vadd.f32 %v545, %v577
        %v610 = vadd.f32 %v546, %v578
        %v611 = vadd.f32 %v547, %v579
        %v612 = vadd.f32 %v548, %v580
        %v613 = vadd.f32 %v549, %v581
        %v614 = vadd.f32 %v550, %v582
        %v615 = vrot.slane %v535, 2
        %v616 = vrot.slane %v536, 2
        %v617 = vrot.slane %v537, 2
        %v618 = vrot.slane %v538, 2
        %v619 = vrot.slane %v539, 2
        %v620 = vrot.slane %v540, 2
        %v621 = vrot.slane %v541, 2
        %v622 = vrot.slane %v542, 2
        %v623 = vrot.slane %v543, 2
        %v624 = vrot.slane %v544, 2
        %v625 = vrot.slane %v545, 2
        %v626 = vrot.slane %v546, 2
        %v627 = vrot.slane %v547, 2
        %v628 = vrot.slane %v548, 2
        %v629 = vrot.slane %v549, 2
        %v630 = vrot.slane %v550, 2
        %v647 = vadd.f32 %v599, %v615
        %v648 = vadd.f32 %v600, %v616
        %v649 = vadd.f32 %v601, %v617
        %v650 = vadd.f32 %v602, %v618
        %v651 = vadd.f32 %v603, %v619
        %v652 = vadd.f32 %v604, %v620
        %v653 = vadd.f32 %v605, %v621
        %v654 = vadd.f32 %v606, %v622
        %v655 = vadd.f32 %v607, %v623
        %v656 = vadd.f32 %v608, %v624
        %v657 = vadd.f32 %v609, %v625
        %v658 = vadd.f32 %v610, %v626
        %v659 = vadd.f32 %v611, %v627
        %v660 = vadd.f32 %v612, %v628
        %v661 = vadd.f32 %v613, %v629
        %v662 = vadd.f32 %v614, %v630
        %v663 = vrot.slane %v535, 3
        %v664 = vrot.slane %v536, 3
        %v665 = vrot.slane %v537, 3
        %v666 = vrot.slane %v538, 3
        %v667 = vrot.slane %v539, 3
        %v668 = vrot.slane %v540, 3
        %v669 = vrot.slane %v541, 3
        %v670 = vrot.slane %v542, 3
        %v671 = vrot.slane %v543, 3
        %v672 = vrot.slane %v544, 3
        %v673 = vrot.slane %v545, 3
        %v674 = vrot.slane %v546, 3
        %v675 = vrot.slane %v547, 3
        %v676 = vrot.slane %v548, 3
        %v677 = vrot.slane %v549, 3
        %v678 = vrot.slane %v550, 3
        %v695 = vadd.f32 %v647, %v663
        %v696 = vadd.f32 %v648, %v664
        %v697 = vadd.f32 %v649, %v665
        %v698 = vadd.f32 %v650, %v666
        %v699 = vadd.f32 %v651, %v667
        %v700 = vadd.f32 %v652, %v668
        %v701 = vadd.f32 %v653, %v669
        %v702 = vadd.f32 %v654, %v670
        %v703 = vadd.f32 %v655, %v671
        %v704 = vadd.f32 %v656, %v672
        %v705 = vadd.f32 %v657, %v673
        %v706 = vadd.f32 %v658, %v674
        %v707 = vadd.f32 %v659, %v675
        %v708 = vadd.f32 %v660, %v676
        %v709 = vadd.f32 %v661, %v677
        %v710 = vadd.f32 %v662, %v678
        %v711 = vrot.slane %v535, 4
        %v712 = vrot.slane %v536, 4
        %v713 = vrot.slane %v537, 4
        %v714 = vrot.slane %v538, 4
        %v715 = vrot.slane %v539, 4
        %v716 = vrot.slane %v540, 4
        %v717 = vrot.slane %v541, 4
        %v718 = vrot.slane %v542, 4
        %v719 = vrot.slane %v543, 4
        %v720 = vrot.slane %v544, 4
        %v721 = vrot.slane %v545, 4
        %v722 = vrot.slane %v546, 4
        %v723 = vrot.slane %v547, 4
        %v724 = vrot.slane %v548, 4
        %v725 = vrot.slane %v549, 4
        %v726 = vrot.slane %v550, 4
        %v743 = vadd.f32 %v695, %v711
        %v744 = vadd.f32 %v696, %v712
        %v745 = vadd.f32 %v697, %v713
        %v746 = vadd.f32 %v698, %v714
        %v747 = vadd.f32 %v699, %v715
        %v748 = vadd.f32 %v700, %v716
        %v749 = vadd.f32 %v701, %v717
        %v750 = vadd.f32 %v702, %v718
        %v751 = vadd.f32 %v703, %v719
        %v752 = vadd.f32 %v704, %v720
        %v753 = vadd.f32 %v705, %v721
        %v754 = vadd.f32 %v706, %v722
        %v755 = vadd.f32 %v707, %v723
        %v756 = vadd.f32 %v708, %v724
        %v757 = vadd.f32 %v709, %v725
        %v758 = vadd.f32 %v710, %v726
        %v759 = vrot.slane %v535, 5
        %v760 = vrot.slane %v536, 5
        %v761 = vrot.slane %v537, 5
        %v762 = vrot.slane %v538, 5
        %v763 = vrot.slane %v539, 5
        %v764 = vrot.slane %v540, 5
        %v765 = vrot.slane %v541, 5
        %v766 = vrot.slane %v542, 5
        %v767 = vrot.slane %v543, 5
        %v768 = vrot.slane %v544, 5
        %v769 = vrot.slane %v545, 5
        %v770 = vrot.slane %v546, 5
        %v771 = vrot.slane %v547, 5
        %v772 = vrot.slane %v548, 5
        %v773 = vrot.slane %v549, 5
        %v774 = vrot.slane %v550, 5
        %v791 = vadd.f32 %v743, %v759
        %v792 = vadd.f32 %v744, %v760
        %v793 = vadd.f32 %v745, %v761
        %v794 = vadd.f32 %v746, %v762
        %v795 = vadd.f32 %v747, %v763
        %v796 = vadd.f32 %v748, %v764
        %v797 = vadd.f32 %v749, %v765
        %v798 = vadd.f32 %v750, %v766
        %v799 = vadd.f32 %v751, %v767
        %v800 = vadd.f32 %v752, %v768
        %v801 = vadd.f32 %v753, %v769
        %v802 = vadd.f32 %v754, %v770
        %v803 = vadd.f32 %v755, %v771
        %v804 = vadd.f32 %v756, %v772
        %v805 = vadd.f32 %v757, %v773
        %v806 = vadd.f32 %v758, %v774
        %v807 = vrot.slane %v535, 6
        %v808 = vrot.slane %v536, 6
        %v809 = vrot.slane %v537, 6
        %v810 = vrot.slane %v538, 6
        %v811 = vrot.slane %v539, 6
        %v812 = vrot.slane %v540, 6
        %v813 = vrot.slane %v541, 6
        %v814 = vrot.slane %v542, 6
        %v815 = vrot.slane %v543, 6
        %v816 = vrot.slane %v544, 6
        %v817 = vrot.slane %v545, 6
        %v818 = vrot.slane %v546, 6
        %v819 = vrot.slane %v547, 6
        %v820 = vrot.slane %v548, 6
        %v821 = vrot.slane %v549, 6
        %v822 = vrot.slane %v550, 6
        %v839 = vadd.f32 %v791, %v807
        %v840 = vadd.f32 %v792, %v808
        %v841 = vadd.f32 %v793, %v809
        %v842 = vadd.f32 %v794, %v810
        %v843 = vadd.f32 %v795, %v811
        %v844 = vadd.f32 %v796, %v812
        %v845 = vadd.f32 %v797, %v813
        %v846 = vadd.f32 %v798, %v814
        %v847 = vadd.f32 %v799, %v815
        %v848 = vadd.f32 %v800, %v816
        %v849 = vadd.f32 %v801, %v817
        %v850 = vadd.f32 %v802, %v818
        %v851 = vadd.f32 %v803, %v819
        %v852 = vadd.f32 %v804, %v820
        %v853 = vadd.f32 %v805, %v821
        %v854 = vadd.f32 %v806, %v822
        %v855 = vmul.f32 %v839, 0.020408163
        %v856 = vmul.f32 %v840, 0.020408163
        %v857 = vmul.f32 %v841, 0.020408163
        %v858 = vmul.f32 %v842, 0.020408163
        %v859 = vmul.f32 %v843, 0.020408163
        %v860 = vmul.f32 %v844, 0.020408163
        %v861 = vmul.f32 %v845, 0.020408163
        %v862 = vmul.f32 %v846, 0.020408163
        %v863 = vmul.f32 %v847, 0.020408163
        %v864 = vmul.f32 %v848, 0.020408163
        %v865 = vmul.f32 %v849, 0.020408163
        %v866 = vmul.f32 %v850, 0.020408163
        %v867 = vmul.f32 %v851, 0.020408163
        %v868 = vmul.f32 %v852, 0.020408163
        %v869 = vmul.f32 %v853, 0.020408163
        %v870 = vmul.f32 %v854, 0.020408163
        %887 = vst [vmem:[#allocation1] ss:$4 sm:$0xff] %v855
        %s888 = scalar_lea.vmem [#allocation1], 1
        %889 = vst [vmem:[%s888] ss:$4 sm:$0xff] %v856
        %s890 = scalar_lea.vmem [#allocation1], 2
        %891 = vst [vmem:[%s890] ss:$4 sm:$0xff] %v857
        %s892 = scalar_lea.vmem [#allocation1], 3
        %893 = vst [vmem:[%s892] ss:$4 sm:$0xff] %v858
        %s894 = scalar_lea.vmem [#allocation1], 32
        %895 = vst [vmem:[%s894] ss:$4 sm:$0xff] %v859
        %s896 = scalar_lea.vmem [#allocation1], 33
        %897 = vst [vmem:[%s896] ss:$4 sm:$0xff] %v860
        %s898 = scalar_lea.vmem [#allocation1], 34
        %899 = vst [vmem:[%s898] ss:$4 sm:$0xff] %v861
        %s900 = scalar_lea.vmem [#allocation1], 35
        %901 = vst [vmem:[%s900] ss:$4 sm:$0xff] %v862
        %v902 = vld.sshfl [vmem:[#allocation1] sm:$0xff pattern:$0x73625140]
        %v903 = vld.sshfl [vmem:[#allocation1 + $0x20] sm:$0xff pattern:$0x73625140]
        %904 = vst [vmem:[#allocation1] ss:$4 sm:$0xff] %v863
        %905 = vst [vmem:[%s888] ss:$4 sm:$0xff] %v864
        %906 = vst [vmem:[%s890] ss:$4 sm:$0xff] %v865
        %907 = vst [vmem:[%s892] ss:$4 sm:$0xff] %v866
        %908 = vst [vmem:[%s894] ss:$4 sm:$0xff] %v867
        %909 = vst [vmem:[%s896] ss:$4 sm:$0xff] %v868
        %910 = vst [vmem:[%s898] ss:$4 sm:$0xff] %v869
        %911 = vst [vmem:[%s900] ss:$4 sm:$0xff] %v870
        %v912 = vld.sshfl [vmem:[#allocation1] sm:$0xff pattern:$0x73625140]
        %v913 = vld.sshfl [vmem:[#allocation1 + $0x20] sm:$0xff pattern:$0x73625140]
        %v918 = vpack.c.bf16 %v903, %v902
        %v919 = vpack.c.bf16 %v913, %v912
        %v920 = vld [vmem:[#allocation5] sm:$0xf]
        %v921 = vld [vmem:[#allocation5 + $0x4] sm:$0xf]
        %v922 = vld [vmem:[#allocation5 + $0x8] sm:$0xf]
        %v923 = vld [vmem:[#allocation5 + $0xc] sm:$0xf]
        %v928 = vunpack.c.l.b16 %v920
        %v929 = vunpack.c.l.b16 %v921
        %v930 = vunpack.c.l.b16 %v922
        %v931 = vunpack.c.l.b16 %v923
        %v932 = vpack.c.b16 %v929, %v928
        %v933 = vpack.c.b16 %v931, %v930
        %vm936 = vcmask 261120
        %v938 = vsel %vm936, %v918, 0
        %v941 = vsel %vm936, %v919, 0
        %943 = vmatpush.bf16.msra.mxu0 0
        %944 = vmatpush.bf16.msra.mxu0 0
        %945 = vmatpush.bf16.msra.mxu0 0
        %946 = vmatpush.bf16.msra.mxu0 0
        %947 = vmatpush.bf16.msra.mxu0 0
        %948 = vmatpush.bf16.msra.mxu0 0
        %949 = vmatpush.bf16.msra.mxu0 %v933
        %950 = vmatpush.bf16.msra.mxu0 %v932
        %951 = vmatmul.bf16.gmra.mxu0 %v938
        %v952 = vpop.f32.mrf.mxu0
        %v953 = vadd.f32 0.0, %v952
        %v954 = vpop.f32.mrf.mxu0
        %v955 = vadd.f32 0.0, %v954
        %956 = vmatmul.bf16.gmra.mxu0 %v941
        %v957 = vpop.f32.mrf.mxu0
        %v958 = vadd.f32 0.0, %v957
        %v959 = vpop.f32.mrf.mxu0
        %v960 = vadd.f32 0.0, %v959
        %961 = vdwg.mxu0
        %v966 = vrot.slane %v953, 4
        %v967 = vrot.slane %v955, 4
        %v968 = vrot.slane %v958, 4
        %v969 = vrot.slane %v960, 4
        %vm974 = vcmask 1043456
        %v975 = vsel %vm974, %v953, 0.0
        %v976 = vrot.slane %v975, 4
        %v977 = vadd.f32 %v975, %v976
        %v978 = vrot.slane %v977, 2
        %v979 = vadd.f32 %v977, %v978
        %v980 = vrot.slane %v979, 1
        %v981 = vadd.f32 %v979, %v980
        %v982 = vsel %vm974, %v966, 0.0
        %v983 = vrot.slane %v982, 4
        %v984 = vadd.f32 %v982, %v983
        %v985 = vrot.slane %v984, 2
        %v986 = vadd.f32 %v984, %v985
        %v987 = vrot.slane %v986, 1
        %v988 = vadd.f32 %v986, %v987
        %v989 = vsel %vm974, %v955, 0.0
        %v990 = vrot.slane %v989, 4
        %v991 = vadd.f32 %v989, %v990
        %v992 = vrot.slane %v991, 2
        %v993 = vadd.f32 %v991, %v992
        %v994 = vrot.slane %v993, 1
        %v995 = vadd.f32 %v993, %v994
        %v996 = vsel %vm974, %v967, 0.0
        %v997 = vrot.slane %v996, 4
        %v998 = vadd.f32 %v996, %v997
        %v999 = vrot.slane %v998, 2
        %v1000 = vadd.f32 %v998, %v999
        %v1001 = vrot.slane %v1000, 1
        %v1002 = vadd.f32 %v1000, %v1001
        %v1003 = vsel %vm974, %v958, 0.0
        %v1004 = vrot.slane %v1003, 4
        %v1005 = vadd.f32 %v1003, %v1004
        %v1006 = vrot.slane %v1005, 2
        %v1007 = vadd.f32 %v1005, %v1006
        %v1008 = vrot.slane %v1007, 1
        %v1009 = vadd.f32 %v1007, %v1008
        %v1010 = vsel %vm974, %v968, 0.0
        %v1011 = vrot.slane %v1010, 4
        %v1012 = vadd.f32 %v1010, %v1011
        %v1013 = vrot.slane %v1012, 2
        %v1014 = vadd.f32 %v1012, %v1013
        %v1015 = vrot.slane %v1014, 1
        %v1016 = vadd.f32 %v1014, %v1015
        %v1017 = vsel %vm974, %v960, 0.0
        %v1018 = vrot.slane %v1017, 4
        %v1019 = vadd.f32 %v1017, %v1018
        %v1020 = vrot.slane %v1019, 2
        %v1021 = vadd.f32 %v1019, %v1020
        %v1022 = vrot.slane %v1021, 1
        %v1023 = vadd.f32 %v1021, %v1022
        %v1024 = vsel %vm974, %v969, 0.0
        %v1025 = vrot.slane %v1024, 4
        %v1026 = vadd.f32 %v1024, %v1025
        %v1027 = vrot.slane %v1026, 2
        %v1028 = vadd.f32 %v1026, %v1027
        %v1029 = vrot.slane %v1028, 1
        %v1030 = vadd.f32 %v1028, %v1029
        %v1031 = vrcp.pop 4.0
        %v1032 = vmul.f32 4.0, %v1031
        %v1033 = vsub.f32 1.0, %v1032
        %v1034 = vmul.f32 %v1031, %v1033
        %v1035 = vadd.f32 %v1031, %v1034
        %vm1036 = vweird.f32 %v1031
        %v1037 = vsel %vm1036, %v1031, %v1035
        %v1038 = vmul.f32 %v981, %v1037
        %v1039 = vmul.f32 %v988, %v1037
        %v1040 = vmul.f32 %v995, %v1037
        %v1041 = vmul.f32 %v1002, %v1037
        %v1042 = vmul.f32 %v1009, %v1037
        %v1043 = vmul.f32 %v1016, %v1037
        %v1044 = vmul.f32 %v1023, %v1037
        %v1045 = vmul.f32 %v1030, %v1037
        %v1046 = vsel %vm974, %v953, -inf
        %v1047 = vrot.slane %v1046, 4
        %v1048 = vmax.f32 %v1046, %v1047
        %v1049 = vrot.slane %v1048, 2
        %v1050 = vmax.f32 %v1048, %v1049
        %v1051 = vrot.slane %v1050, 1
        %v1052 = vmax.f32 %v1050, %v1051
        %v1053 = vsel %vm974, %v966, -inf
        %v1054 = vrot.slane %v1053, 4
        %v1055 = vmax.f32 %v1053, %v1054
        %v1056 = vrot.slane %v1055, 2
        %v1057 = vmax.f32 %v1055, %v1056
        %v1058 = vrot.slane %v1057, 1
        %v1059 = vmax.f32 %v1057, %v1058
        %v1060 = vsel %vm974, %v955, -inf
        %v1061 = vrot.slane %v1060, 4
        %v1062 = vmax.f32 %v1060, %v1061
        %v1063 = vrot.slane %v1062, 2
        %v1064 = vmax.f32 %v1062, %v1063
        %v1065 = vrot.slane %v1064, 1
        %v1066 = vmax.f32 %v1064, %v1065
        %v1067 = vsel %vm974, %v967, -inf
        %v1068 = vrot.slane %v1067, 4
        %v1069 = vmax.f32 %v1067, %v1068
        %v1070 = vrot.slane %v1069, 2
        %v1071 = vmax.f32 %v1069, %v1070
        %v1072 = vrot.slane %v1071, 1
        %v1073 = vmax.f32 %v1071, %v1072
        %v1074 = vsel %vm974, %v958, -inf
        %v1075 = vrot.slane %v1074, 4
        %v1076 = vmax.f32 %v1074, %v1075
        %v1077 = vrot.slane %v1076, 2
        %v1078 = vmax.f32 %v1076, %v1077
        %v1079 = vrot.slane %v1078, 1
        %v1080 = vmax.f32 %v1078, %v1079
        %v1081 = vsel %vm974, %v968, -inf
        %v1082 = vrot.slane %v1081, 4
        %v1083 = vmax.f32 %v1081, %v1082
        %v1084 = vrot.slane %v1083, 2
        %v1085 = vmax.f32 %v1083, %v1084
        %v1086 = vrot.slane %v1085, 1
        %v1087 = vmax.f32 %v1085, %v1086
        %v1088 = vsel %vm974, %v960, -inf
        %v1089 = vrot.slane %v1088, 4
        %v1090 = vmax.f32 %v1088, %v1089
        %v1091 = vrot.slane %v1090, 2
        %v1092 = vmax.f32 %v1090, %v1091
        %v1093 = vrot.slane %v1092, 1
        %v1094 = vmax.f32 %v1092, %v1093
        %v1095 = vsel %vm974, %v969, -inf
        %v1096 = vrot.slane %v1095, 4
        %v1097 = vmax.f32 %v1095, %v1096
        %v1098 = vrot.slane %v1097, 2
        %v1099 = vmax.f32 %v1097, %v1098
        %v1100 = vrot.slane %v1099, 1
        %v1101 = vmax.f32 %v1099, %v1100
        %v1102 = vadd.f32 %v1038, %v1052
        %v1103 = vadd.f32 %v1039, %v1059
        %v1104 = vadd.f32 %v1040, %v1066
        %v1105 = vadd.f32 %v1041, %v1073
        %v1106 = vadd.f32 %v1042, %v1080
        %v1107 = vadd.f32 %v1043, %v1087
        %v1108 = vadd.f32 %v1044, %v1094
        %v1109 = vadd.f32 %v1045, %v1101
        %v1110 = vmul.f32 %v1102, 0.5
        %v1111 = vmul.f32 %v1103, 0.5
        %v1112 = vmul.f32 %v1104, 0.5
        %v1113 = vmul.f32 %v1105, 0.5
        %v1114 = vmul.f32 %v1106, 0.5
        %v1115 = vmul.f32 %v1107, 0.5
        %v1116 = vmul.f32 %v1108, 0.5
        %v1117 = vmul.f32 %v1109, 0.5
        %v1118 = vld [vmem:[%s2] sm:$0x1]
        %v1120 = vperm.slane %v1118, 0
        %v1122 = vadd.f32 %v1110, %v1120
        %v1123 = vadd.f32 %v1111, %v1120
        %v1124 = vadd.f32 %v1112, %v1120
        %v1125 = vadd.f32 %v1113, %v1120
        %v1126 = vadd.f32 %v1114, %v1120
        %v1127 = vadd.f32 %v1115, %v1120
        %v1128 = vadd.f32 %v1116, %v1120
        %v1129 = vadd.f32 %v1117, %v1120
        %v1138 = vrot.slane %v1123, 7
        %vm1139 = vcmask 1041409
        %v1140 = vsel %vm1139, %v1138, %v1122
        %v1141 = vrot.slane %v1124, 6
        %vm1142 = vcmask 1042434
        %v1143 = vsel %vm1142, %v1141, %v1140
        %v1144 = vrot.slane %v1125, 5
        %vm1145 = vcmask 1043459
        %v1146 = vsel %vm1145, %v1144, %v1143
        %v1147 = vrot.slane %v1126, 4
        %vm1148 = vcmask 1044484
        %v1149 = vsel %vm1148, %v1147, %v1146
        %v1150 = vrot.slane %v1127, 3
        %vm1151 = vcmask 1045509
        %v1152 = vsel %vm1151, %v1150, %v1149
        %v1153 = vrot.slane %v1128, 2
        %vm1154 = vcmask 1046534
        %v1155 = vsel %vm1154, %v1153, %v1152
        %v1156 = vrot.slane %v1129, 1
        %vm1157 = vcmask 1047559
        %v1158 = vsel %vm1157, %v1156, %v1155
        %1160 = vst [vmem:[%s217] sm:$0xff] %v1158
        %s1161 = sand.u32 %s97, 1
        %s1162 = scalar_lea.sflag [#allocation4], %s1161
        %s1163 = sand.u32 %s97, 1
        %s1164 = smul.addr %s1163, 8
        %s1165 = scalar_lea.vmem [#allocation7], %s1164
        // Predicated region
        $region41: #{tpu_custom_call.1} parent=31 // pred_check
          %p1166 = pneg %p107
        $region42: #{tpu_custom_call.1} parent=31 // pred_check_branch
          %1168 = sbr.rel (%p1166) target = $region44
        $region43: #{tpu_custom_call.1} parent=31 // pred_region
          %1170 = vsyncadd %s1162, 0
          %s1171 = smul.addr %s21, 8
          %s1172 = scalar_lea.hbm %s3, %s1171
          %s1174 = sshll.u32 %s1165, 4
          %s1175 = int_to_ptr.vmem [resolvable:$true] %s1174
          %s1176 = sshll.u32 %s1172, 4
          %s1177 = int_to_ptr.hbm [resolvable:$true] %s1176
          %1179 = dma.vmem_to_hbm [thread:$0]  %s1175, 128, %s1177, %s1162
        $region44: #{tpu_custom_call.1} parent=31 // pred_fallthru
          _
      $region32: #{tpu_custom_call.1} parent=5 // pred_fallthru
        _
      %p1180 = scmp.le.s32.totalorder 2, %s16
      // Predicated region
      $region45: #{tpu_custom_call.1} parent=5 // pred_check
        %p1181 = pneg %p1180
      $region46: #{tpu_custom_call.1} parent=5 // pred_check_branch
        %1183 = sbr.rel (%p1181) target = $region48
      $region47: #{tpu_custom_call.1} parent=5 // pred_region
        %s1184 = ssub.s32 %s16, 2
        // Predicated region
        $region49: #{tpu_custom_call.1} parent=47 // pred_check
          %p1185 = pneg %p113
        $region50: #{tpu_custom_call.1} parent=47 // pred_check_branch
          %1187 = sbr.rel (%p1185) target = $region52
        $region51: #{tpu_custom_call.1} parent=47 // pred_region
          %s1188 = sand.u32 %s98, 1
          %s1189 = scalar_lea.sflag [#allocation4], %s1188
          %s1190 = sand.u32 %s98, 1
          %s1191 = smul.addr %s1190, 8
          %s1192 = scalar_lea.vmem [#allocation7], %s1191
          %1194 = dma.done %s1189, 128
        $region52: #{tpu_custom_call.1} parent=47 // pred_fallthru
          _
      $region48: #{tpu_custom_call.1} parent=5 // pred_fallthru
        _
    $region6: #{tpu_custom_call.1} parent=1 // loop_footer
      %s20 = sadd.s32 1, %s16
    $region7: #{tpu_custom_call.1} parent=1 // loop_footer_branch
      %15 = sbr.rel target = $region3
    $region8: #{tpu_custom_call.1} parent=1 // loop_exit
      _
    %1195 = vsyncpa [#allocation3], 1
    %s1196 = scalar_lea.sflag [#allocation3], 1
    %1197 = vsyncpa %s1196, 1
    %1198 = vsyncpa [#allocation6], 1
    %1199 = vsyncpa [#allocation4], 1
    %s1200 = scalar_lea.sflag [#allocation4], 1
    %1201 = vsyncpa %s1200, 1

// kernel: tpu_custom_call.1
$region0: #{tpu_custom_call.1}
  #allocation0 [shape = 'u32[]', space=smem, size = 0x4, offset = 0x4, fixed_abs, tag = 'smem constant byte address 0x4 - core index']
  #allocation1 [shape = 'u32[72,128]{1,0:T(1,128)}', space=vmem, size = 0x9000, scoped, tag = 'internal scratch']
  %s0 = inlined_call_operand.hbm [shape: bf16[10,8,8,32], index: 0, kind: input, shape index: {}]
  %s1 = inlined_call_operand.hbm [shape: bf16[32,128], index: 1, kind: input, shape index: {}]
  %s2 = inlined_call_operand.vmem [shape: f32[1,128], index: 2, kind: input, shape index: {}]
  %s3 = inlined_call_operand.hbm [shape: f32[10,128], index: 3, kind: output, shape index: {}]
  %s4 = sld [smem:[#allocation0]]
  $region53: #{tpu_custom_call.1} parent=0
    _
  %s6 = ssub.s32 1, %s4
  %s7 = scalar_select 0, %s6, %s4
  $region1: #{tpu_custom_call.1} parent=0
    #allocation2 [shape = 'u8[262144]{0}', space=vmem, size = 0x40000, scoped, tag = 'input window, operand 0']
    #allocation3 [shape = 's32[2]{0}', space=sflag, size = 0x8, scoped, tag = 'scoped memory for tpu_custom_call.1']
    #allocation4 [shape = 's32[2]{0}', space=sflag, size = 0x8, scoped, tag = 'scoped memory for tpu_custom_call.1']
    #allocation5 [shape = 'u8[8192]{0}', space=vmem, size = 0x2000, scoped, tag = 'input window, operand 1, single buffered']
    #allocation6 [shape = 's32[1]{0}', space=sflag, size = 0x4, scoped, tag = 'scoped memory for tpu_custom_call.1']
    #allocation7 [shape = 'u8[8192]{0}', space=vmem, size = 0x2000, scoped, tag = 'output window, operand 0']
    %8 = vsyncpa [#allocation3], 0
    %s9 = scalar_lea.sflag [#allocation3], 1
    %10 = vsyncpa %s9, 0
    %11 = vsyncpa [#allocation6], 0
    %12 = vsyncpa [#allocation4], 0
    %s13 = scalar_lea.sflag [#allocation4], 1
    %14 = vsyncpa %s13, 0
    loop: start=0, step=1, limit=4
    $region2: #{tpu_custom_call.1} parent=1 // loop_pre_header
      _
    $region3: #{tpu_custom_call.1} parent=1 // loop_header
      %s16 = sphi 0, %s20
      %p17 = scmp.ge.s32.totalorder %s16, 4
      %s26 = sphi 0, %s28
      %s29 = sphi 0, %s26
      %s30 = sphi 0, %s29
      %s46 = sphi 0, %s30
      %s50 = sphi 0, %s50
      %s52 = sphi 0, %s50
      %s53 = sphi 0, %s52
      %s67 = sphi 0, %s53
      %s71 = sphi 0, %s71
      %s73 = sphi 0, %s71
      %s74 = sphi 0, %s73
      %s88 = sphi 0, %s74
      %s94 = sphi 0, %s96
      %s97 = sphi 0, %s94
      %s98 = sphi 0, %s97
      %s114 = sphi 0, %s98
    $region4: #{tpu_custom_call.1} parent=1 // loop_header_branch
      %19 = sbr.rel (%p17) target = $region8
    $region5: #{tpu_custom_call.1} parent=1 // loop_body
      %s21 = ssub.s32 %s16, 1
      %s22 = ssub.s32 %s16, 2
      %s23 = sadd.s32 %s16, 1
      %s24 = ssub.s32 %s16, %s23
      %p25 = scmp.eq.s32.totalorder %s24, 0
      %s27 = sadd.s32 %s26, 1
      %s28 = scalar_select %p25, %s26, %s27
      %p31 = pneg %p25
      %p32 = scmp.eq.s32.totalorder %s16, 1
      %p33 = por %p31, %p32
      %p34 = scmp.ne.s32.totalorder %s26, %s29
      %p35 = scmp.eq.s32.totalorder %s16, 0
      %p36 = por %p34, %p35
      %p37 = scmp.ne.s32.totalorder %s26, %s29
      %p38 = scmp.eq.s32.totalorder %s21, 1
      %p39 = por %p37, %p38
      %p40 = scmp.ne.s32.totalorder %s29, %s30
      %p41 = scmp.eq.s32.totalorder %s21, 0
      %p42 = por %p40, %p41
      %p43 = scmp.ne.s32.totalorder %s29, %s30
      %p44 = scmp.eq.s32.totalorder %s22, 1
      %p45 = por %p43, %p44
      %p47 = scmp.ne.s32.totalorder %s30, %s46
      %p48 = scmp.eq.s32.totalorder %s22, 0
      %p49 = por %p47, %p48
      %s51 = sadd.s32 %s50, 1
      %p54 = scmp.eq.s32.totalorder %s16, 1
      %p55 = scmp.ne.s32.totalorder %s50, %s52
      %p56 = scmp.eq.s32.totalorder %s16, 0
      %p57 = por %p55, %p56
      %p58 = scmp.ne.s32.totalorder %s50, %s52
      %p59 = scmp.eq.s32.totalorder %s21, 1
      %p60 = por %p58, %p59
      %p61 = scmp.ne.s32.totalorder %s52, %s53
      %p62 = scmp.eq.s32.totalorder %s21, 0
      %p63 = por %p61, %p62
      %p64 = scmp.ne.s32.totalorder %s52, %s53
      %p65 = scmp.eq.s32.totalorder %s22, 1
      %p66 = por %p64, %p65
      %p68 = scmp.ne.s32.totalorder %s53, %s67
      %p69 = scmp.eq.s32.totalorder %s22, 0
      %p70 = por %p68, %p69
      %s72 = sadd.s32 %s71, 1
      %p75 = scmp.eq.s32.totalorder %s16, 1
      %p76 = scmp.ne.s32.totalorder %s71, %s73
      %p77 = scmp.eq.s32.totalorder %s16, 0
      %p78 = por %p76, %p77
      %p79 = scmp.ne.s32.totalorder %s71, %s73
      %p80 = scmp.eq.s32.totalorder %s21, 1
      %p81 = por %p79, %p80
      %p82 = scmp.ne.s32.totalorder %s73, %s74
      %p83 = scmp.eq.s32.totalorder %s21, 0
      %p84 = por %p82, %p83
      %p85 = scmp.ne.s32.totalorder %s73, %s74
      %p86 = scmp.eq.s32.totalorder %s22, 1
      %p87 = por %p85, %p86
      %p89 = scmp.ne.s32.totalorder %s74, %s88
      %p90 = scmp.eq.s32.totalorder %s22, 0
      %p91 = por %p89, %p90
      %s92 = ssub.s32 %s16, %s23
      %p93 = scmp.eq.s32.totalorder %s92, 0
      %s95 = sadd.s32 %s94, 1
      %s96 = scalar_select %p93, %s94, %s95
      %p99 = pneg %p93
      %p100 = scmp.eq.s32.totalorder %s16, 1
      %p101 = por %p99, %p100
      %p102 = scmp.ne.s32.totalorder %s94, %s97
      %p103 = scmp.eq.s32.totalorder %s16, 0
      %p104 = por %p102, %p103
      %p105 = scmp.ne.s32.totalorder %s94, %s97
      %p106 = scmp.eq.s32.totalorder %s21, 1
      %p107 = por %p105, %p106
      %p108 = scmp.ne.s32.totalorder %s97, %s98
      %p109 = scmp.eq.s32.totalorder %s21, 0
      %p110 = por %p108, %p109
      %p111 = scmp.ne.s32.totalorder %s97, %s98
      %p112 = scmp.eq.s32.totalorder %s22, 1
      %p113 = por %p111, %p112
      %p115 = scmp.ne.s32.totalorder %s98, %s114
      %p116 = scmp.eq.s32.totalorder %s22, 0
      %p117 = por %p115, %p116
      %p118 = scmp.le.s32.totalorder 1, %s16
      %p119 = scmp.lt.s32.totalorder %s16, 3
      %p120 = pnand %p118, %p119
      %p121 = pneg %p120
      // Predicated region
      $region9: #{tpu_custom_call.1} parent=5 // pred_check
        _
      $region10: #{tpu_custom_call.1} parent=5 // pred_check_branch
        %123 = sbr.rel (%p120) target = $region12
      $region11: #{tpu_custom_call.1} parent=5 // pred_region
        %s124 = ssub.s32 %s16, 1
        // Predicated region
        $region13: #{tpu_custom_call.1} parent=11 // pred_check
          %p125 = pneg %p63
        $region14: #{tpu_custom_call.1} parent=11 // pred_check_branch
          %127 = sbr.rel (%p125) target = $region16
        $region15: #{tpu_custom_call.1} parent=11 // pred_region
          %129 = vsyncadd [#allocation6], 0
          %s130 = sshll.u32 %s1, 4
          %s131 = int_to_ptr.hbm [resolvable:$true] %s130
          %s132 = sshll.u32 [#allocation5], 4
          %s133 = int_to_ptr.vmem [resolvable:$true] %s132
          %138 = dma.hbm_to_vmem [thread:$0]  %s131, 256, %s133, [#allocation6], 64, 64, 4
        $region16: #{tpu_custom_call.1} parent=11 // pred_fallthru
          _
        // Predicated region
        $region17: #{tpu_custom_call.1} parent=11 // pred_check
          %p139 = pneg %p84
        $region18: #{tpu_custom_call.1} parent=11 // pred_check_branch
          %141 = sbr.rel (%p139) target = $region20
        $region19: #{tpu_custom_call.1} parent=11 // pred_region
          _
        $region20: #{tpu_custom_call.1} parent=11 // pred_fallthru
          _
      $region12: #{tpu_custom_call.1} parent=5 // pred_fallthru
        _
      %p142 = scmp.lt.s32.totalorder %s16, 2
      // Predicated region
      $region21: #{tpu_custom_call.1} parent=5 // pred_check
        %p143 = pneg %p142
      $region22: #{tpu_custom_call.1} parent=5 // pred_check_branch
        %145 = sbr.rel (%p143) target = $region24
      $region23: #{tpu_custom_call.1} parent=5 // pred_region
        // Predicated region
        $region25: #{tpu_custom_call.1} parent=23 // pred_check
          %p146 = pneg %p36
        $region26: #{tpu_custom_call.1} parent=23 // pred_check_branch
          %148 = sbr.rel (%p146) target = $region28
        $region27: #{tpu_custom_call.1} parent=23 // pred_region
          %s149 = sand.u32 %s26, 1
          %s150 = scalar_lea.sflag [#allocation3], %s149
          %s151 = sand.u32 %s26, 1
          %s152 = smul.addr %s151, 256
          %s153 = scalar_lea.vmem [#allocation2], %s152
          %s154 = smul.u32 8, %s16
          %s155 = ssub.s32 10, %s154
          %p156 = scmp.lt.s32.totalorder %s155, 8
          %s157 = scalar_select %p156, %s155, 8
          %s158 = smul.u32 4, %s157
          %s159 = smul.u32 %s158, 8
          %s160 = ssub.s32 256, %s159
          %s161 = sshll.u32 %s160, 4
          %162 = vsyncadd %s150, %s161
          %p163 = scmp.ne.s32.totalorder 0, %s159
          %s164 = smul.addr %s154, 8
          %s165 = smul.addr %s164, 4
          %s166 = scalar_lea.hbm %s0, %s165
          %s167 = smul.u32 %s157, 8
          %s168 = smul.u32 4, %s167
          %s169 = sshll.u32 %s166, 4
          %s170 = int_to_ptr.hbm [resolvable:$true] %s169
          %s171 = sshll.u32 %s153, 4
          %s172 = int_to_ptr.vmem [resolvable:$true] %s171
          %s173 = sshll.u32 %s168, 4
          %177 = dma.hbm_to_vmem [thread:$0]  (%p163), %s170, %s173, %s172, %s150, 64, 64, 4
        $region28: #{tpu_custom_call.1} parent=23 // pred_fallthru
          _
      $region24: #{tpu_custom_call.1} parent=5 // pred_fallthru
        _
      %p178 = scmp.le.s32.totalorder 1, %s16
      %p179 = scmp.lt.s32.totalorder %s16, 3
      %p180 = pnand %p178, %p179
      %p181 = pneg %p180
      // Predicated region
      $region29: #{tpu_custom_call.1} parent=5 // pred_check
        _
      $region30: #{tpu_custom_call.1} parent=5 // pred_check_branch
        %183 = sbr.rel (%p180) target = $region32
      $region31: #{tpu_custom_call.1} parent=5 // pred_region
        %s184 = ssub.s32 %s16, 1
        %s185 = sand.u32 %s29, 1
        %s186 = scalar_lea.sflag [#allocation3], %s185
        %s187 = sand.u32 %s29, 1
        %s188 = smul.addr %s187, 256
        %s189 = scalar_lea.vmem [#allocation2], %s188
        // Predicated region
        $region33: #{tpu_custom_call.1} parent=31 // pred_check
          %p190 = pneg %p42
        $region34: #{tpu_custom_call.1} parent=31 // pred_check_branch
          %192 = sbr.rel (%p190) target = $region36
        $region35: #{tpu_custom_call.1} parent=31 // pred_region
          %194 = dma.done %s186, 4096
        $region36: #{tpu_custom_call.1} parent=31 // pred_fallthru
          _
        // Predicated region
        $region37: #{tpu_custom_call.1} parent=31 // pred_check
          %p195 = pneg %p63
        $region38: #{tpu_custom_call.1} parent=31 // pred_check_branch
          %197 = sbr.rel (%p195) target = $region40
        $region39: #{tpu_custom_call.1} parent=31 // pred_region
          %199 = dma.done [#allocation6], 256
        $region40: #{tpu_custom_call.1} parent=31 // pred_fallthru
          _
        %s200 = sand.u32 %s29, 1
        %s201 = scalar_lea.sflag [#allocation3], %s200
        %s202 = sand.u32 %s29, 1
        %s203 = smul.addr %s202, 256
        %s204 = scalar_lea.vmem [#allocation2], %s203
        %p205 = pneg %p42
        %p206 = pneg %p39
        %p207 = pneg %p63
        %p208 = pneg %p60
        %p209 = pneg %p84
        %p210 = pneg %p81
        %p211 = pneg %p110
        %p212 = pneg %p107
        %s213 = sand.u32 %s97, 1
        %s214 = scalar_lea.sflag [#allocation4], %s213
        %s215 = sand.u32 %s97, 1
        %s216 = smul.addr %s215, 8
        %s217 = scalar_lea.vmem [#allocation7], %s216
        %s218 = smul.u32 8, %s21
        %s219 = ssub.s32 10, %s218
        %p220 = scmp.lt.s32.totalorder %s219, 8
        %s221 = scalar_select %p220, %s219, 8
        %s222 = smul.u32 4, %s221
        %s223 = smul.u32 %s222, 8
        %v225 = vld [vmem:[%s189] sm:$0xf]
        %v226 = vld [vmem:[%s189 + $0x4] sm:$0xf]
        %v227 = vld [vmem:[%s189 + $0x20] sm:$0xf]
        %v228 = vld [vmem:[%s189 + $0x24] sm:$0xf]
        %v229 = vld [vmem:[%s189 + $0x40] sm:$0xf]
        %v230 = vld [vmem:[%s189 + $0x44] sm:$0xf]
        %v231 = vld [vmem:[%s189 + $0x60] sm:$0xf]
        %v232 = vld [vmem:[%s189 + $0x64] sm:$0xf]
        %v233 = vld [vmem:[%s189 + $0x80] sm:$0xf]
        %v234 = vld [vmem:[%s189 + $0x84] sm:$0xf]
        %v235 = vld [vmem:[%s189 + $0xa0] sm:$0xf]
        %v236 = vld [vmem:[%s189 + $0xa4] sm:$0xf]
        %v237 = vld [vmem:[%s189 + $0xc0] sm:$0xf]
        %v238 = vld [vmem:[%s189 + $0xc4] sm:$0xf]
        %v239 = vld [vmem:[%s189 + $0xe0] sm:$0xf]
        %v240 = vld [vmem:[%s189 + $0xe4] sm:$0xf]
        %v241 = vunpack.c.l.bf16 %v225
        %v242 = vunpack.c.l.bf16 %v226
        %v243 = vunpack.c.l.bf16 %v227
        %v244 = vunpack.c.l.bf16 %v228
        %v245 = vunpack.c.l.bf16 %v229
        %v246 = vunpack.c.l.bf16 %v230
        %v247 = vunpack.c.l.bf16 %v231
        %v248 = vunpack.c.l.bf16 %v232
        %v249 = vunpack.c.l.bf16 %v233
        %v250 = vunpack.c.l.bf16 %v234
        %v251 = vunpack.c.l.bf16 %v235
        %v252 = vunpack.c.l.bf16 %v236
        %v253 = vunpack.c.l.bf16 %v237
        %v254 = vunpack.c.l.bf16 %v238
        %v255 = vunpack.c.l.bf16 %v239
        %v256 = vunpack.c.l.bf16 %v240
        %s257 = scalar_lea.vmem %s189, 4 [#allocation2]
        %v258 = vld [vmem:[%s257] sm:$0xf]
        %v259 = vld [vmem:[%s257 + $0x4] sm:$0xf]
        %v260 = vld [vmem:[%s257 + $0x20] sm:$0xf]
        %v261 = vld [vmem:[%s257 + $0x24] sm:$0xf]
        %v262 = vld [vmem:[%s257 + $0x40] sm:$0xf]
        %v263 = vld [vmem:[%s257 + $0x44] sm:$0xf]
        %v264 = vld [vmem:[%s257 + $0x60] sm:$0xf]
        %v265 = vld [vmem:[%s257 + $0x64] sm:$0xf]
        %v266 = vld [vmem:[%s257 + $0x80] sm:$0xf]
        %v267 = vld [vmem:[%s257 + $0x84] sm:$0xf]
        %v268 = vld [vmem:[%s257 + $0xa0] sm:$0xf]
        %v269 = vld [vmem:[%s257 + $0xa4] sm:$0xf]
        %v270 = vld [vmem:[%s257 + $0xc0] sm:$0xf]
        %v271 = vld [vmem:[%s257 + $0xc4] sm:$0xf]
        %v272 = vld [vmem:[%s257 + $0xe0] sm:$0xf]
        %v273 = vld [vmem:[%s257 + $0xe4] sm:$0xf]
        %v274 = vunpack.c.l.bf16 %v258
        %v275 = vunpack.c.l.bf16 %v259
        %v276 = vunpack.c.l.bf16 %v260
        %v277 = vunpack.c.l.bf16 %v261
        %v278 = vunpack.c.l.bf16 %v262
        %v279 = vunpack.c.l.bf16 %v263
        %v280 = vunpack.c.l.bf16 %v264
        %v281 = vunpack.c.l.bf16 %v265
        %v282 = vunpack.c.l.bf16 %v266
        %v283 = vunpack.c.l.bf16 %v267
        %v284 = vunpack.c.l.bf16 %v268
        %v285 = vunpack.c.l.bf16 %v269
        %v286 = vunpack.c.l.bf16 %v270
        %v287 = vunpack.c.l.bf16 %v271
        %v288 = vunpack.c.l.bf16 %v272
        %v289 = vunpack.c.l.bf16 %v273
        %v290 = vadd.f32 %v241, %v274
        %v291 = vadd.f32 %v242, %v275
        %v292 = vadd.f32 %v243, %v276
        %v293 = vadd.f32 %v244, %v277
        %v294 = vadd.f32 %v245, %v278
        %v295 = vadd.f32 %v246, %v279
        %v296 = vadd.f32 %v247, %v280
        %v297 = vadd.f32 %v248, %v281
        %v298 = vadd.f32 %v249, %v282
        %v299 = vadd.f32 %v250, %v283
        %v300 = vadd.f32 %v251, %v284
        %v301 = vadd.f32 %v252, %v285
        %v302 = vadd.f32 %v253, %v286
        %v303 = vadd.f32 %v254, %v287
        %v304 = vadd.f32 %v255, %v288
        %v305 = vadd.f32 %v256, %v289
        %s306 = scalar_lea.vmem %s189, 8 [#allocation2]
        %v307 = vld [vmem:[%s306] sm:$0xf]
        %v308 = vld [vmem:[%s306 + $0x4] sm:$0xf]
        %v309 = vld [vmem:[%s306 + $0x20] sm:$0xf]
        %v310 = vld [vmem:[%s306 + $0x24] sm:$0xf]
        %v311 = vld [vmem:[%s306 + $0x40] sm:$0xf]
        %v312 = vld [vmem:[%s306 + $0x44] sm:$0xf]
        %v313 = vld [vmem:[%s306 + $0x60] sm:$0xf]
        %v314 = vld [vmem:[%s306 + $0x64] sm:$0xf]
        %v315 = vld [vmem:[%s306 + $0x80] sm:$0xf]
        %v316 = vld [vmem:[%s306 + $0x84] sm:$0xf]
        %v317 = vld [vmem:[%s306 + $0xa0] sm:$0xf]
        %v318 = vld [vmem:[%s306 + $0xa4] sm:$0xf]
        %v319 = vld [vmem:[%s306 + $0xc0] sm:$0xf]
        %v320 = vld [vmem:[%s306 + $0xc4] sm:$0xf]
        %v321 = vld [vmem:[%s306 + $0xe0] sm:$0xf]
        %v322 = vld [vmem:[%s306 + $0xe4] sm:$0xf]
        %v323 = vunpack.c.l.bf16 %v307
        %v324 = vunpack.c.l.bf16 %v308
        %v325 = vunpack.c.l.bf16 %v309
        %v326 = vunpack.c.l.bf16 %v310
        %v327 = vunpack.c.l.bf16 %v311
        %v328 = vunpack.c.l.bf16 %v312
        %v329 = vunpack.c.l.bf16 %v313
        %v330 = vunpack.c.l.bf16 %v314
        %v331 = vunpack.c.l.bf16 %v315
        %v332 = vunpack.c.l.bf16 %v316
        %v333 = vunpack.c.l.bf16 %v317
        %v334 = vunpack.c.l.bf16 %v318
        %v335 = vunpack.c.l.bf16 %v319
        %v336 = vunpack.c.l.bf16 %v320
        %v337 = vunpack.c.l.bf16 %v321
        %v338 = vunpack.c.l.bf16 %v322
        %v339 = vadd.f32 %v290, %v323
        %v340 = vadd.f32 %v291, %v324
        %v341 = vadd.f32 %v292, %v325
        %v342 = vadd.f32 %v293, %v326
        %v343 = vadd.f32 %v294, %v327
        %v344 = vadd.f32 %v295, %v328
        %v345 = vadd.f32 %v296, %v329
        %v346 = vadd.f32 %v297, %v330
        %v347 = vadd.f32 %v298, %v331
        %v348 = vadd.f32 %v299, %v332
        %v349 = vadd.f32 %v300, %v333
        %v350 = vadd.f32 %v301, %v334
        %v351 = vadd.f32 %v302, %v335
        %v352 = vadd.f32 %v303, %v336
        %v353 = vadd.f32 %v304, %v337
        %v354 = vadd.f32 %v305, %v338
        %s355 = scalar_lea.vmem %s189, 12 [#allocation2]
        %v356 = vld [vmem:[%s355] sm:$0xf]
        %v357 = vld [vmem:[%s355 + $0x4] sm:$0xf]
        %v358 = vld [vmem:[%s355 + $0x20] sm:$0xf]
        %v359 = vld [vmem:[%s355 + $0x24] sm:$0xf]
        %v360 = vld [vmem:[%s355 + $0x40] sm:$0xf]
        %v361 = vld [vmem:[%s355 + $0x44] sm:$0xf]
        %v362 = vld [vmem:[%s355 + $0x60] sm:$0xf]
        %v363 = vld [vmem:[%s355 + $0x64] sm:$0xf]
        %v364 = vld [vmem:[%s355 + $0x80] sm:$0xf]
        %v365 = vld [vmem:[%s355 + $0x84] sm:$0xf]
        %v366 = vld [vmem:[%s355 + $0xa0] sm:$0xf]
        %v367 = vld [vmem:[%s355 + $0xa4] sm:$0xf]
        %v368 = vld [vmem:[%s355 + $0xc0] sm:$0xf]
        %v369 = vld [vmem:[%s355 + $0xc4] sm:$0xf]
        %v370 = vld [vmem:[%s355 + $0xe0] sm:$0xf]
        %v371 = vld [vmem:[%s355 + $0xe4] sm:$0xf]
        %v372 = vunpack.c.l.bf16 %v356
        %v373 = vunpack.c.l.bf16 %v357
        %v374 = vunpack.c.l.bf16 %v358
        %v375 = vunpack.c.l.bf16 %v359
        %v376 = vunpack.c.l.bf16 %v360
        %v377 = vunpack.c.l.bf16 %v361
        %v378 = vunpack.c.l.bf16 %v362
        %v379 = vunpack.c.l.bf16 %v363
        %v380 = vunpack.c.l.bf16 %v364
        %v381 = vunpack.c.l.bf16 %v365
        %v382 = vunpack.c.l.bf16 %v366
        %v383 = vunpack.c.l.bf16 %v367
        %v384 = vunpack.c.l.bf16 %v368
        %v385 = vunpack.c.l.bf16 %v369
        %v386 = vunpack.c.l.bf16 %v370
        %v387 = vunpack.c.l.bf16 %v371
        %v388 = vadd.f32 %v339, %v372
        %v389 = vadd.f32 %v340, %v373
        %v390 = vadd.f32 %v341, %v374
        %v391 = vadd.f32 %v342, %v375
        %v392 = vadd.f32 %v343, %v376
        %v393 = vadd.f32 %v344, %v377
        %v394 = vadd.f32 %v345, %v378
        %v395 = vadd.f32 %v346, %v379
        %v396 = vadd.f32 %v347, %v380
        %v397 = vadd.f32 %v348, %v381
        %v398 = vadd.f32 %v349, %v382
        %v399 = vadd.f32 %v350, %v383
        %v400 = vadd.f32 %v351, %v384
        %v401 = vadd.f32 %v352, %v385
        %v402 = vadd.f32 %v353, %v386
        %v403 = vadd.f32 %v354, %v387
        %s404 = scalar_lea.vmem %s189, 16 [#allocation2]
        %v405 = vld [vmem:[%s404] sm:$0xf]
        %v406 = vld [vmem:[%s404 + $0x4] sm:$0xf]
        %v407 = vld [vmem:[%s404 + $0x20] sm:$0xf]
        %v408 = vld [vmem:[%s404 + $0x24] sm:$0xf]
        %v409 = vld [vmem:[%s404 + $0x40] sm:$0xf]
        %v410 = vld [vmem:[%s404 + $0x44] sm:$0xf]
        %v411 = vld [vmem:[%s404 + $0x60] sm:$0xf]
        %v412 = vld [vmem:[%s404 + $0x64] sm:$0xf]
        %v413 = vld [vmem:[%s404 + $0x80] sm:$0xf]
        %v414 = vld [vmem:[%s404 + $0x84] sm:$0xf]
        %v415 = vld [vmem:[%s404 + $0xa0] sm:$0xf]
        %v416 = vld [vmem:[%s404 + $0xa4] sm:$0xf]
        %v417 = vld [vmem:[%s404 + $0xc0] sm:$0xf]
        %v418 = vld [vmem:[%s404 + $0xc4] sm:$0xf]
        %v419 = vld [vmem:[%s404 + $0xe0] sm:$0xf]
        %v420 = vld [vmem:[%s404 + $0xe4] sm:$0xf]
        %v421 = vunpack.c.l.bf16 %v405
        %v422 = vunpack.c.l.bf16 %v406
        %v423 = vunpack.c.l.bf16 %v407
        %v424 = vunpack.c.l.bf16 %v408
        %v425 = vunpack.c.l.bf16 %v409
        %v426 = vunpack.c.l.bf16 %v410
        %v427 = vunpack.c.l.bf16 %v411
        %v428 = vunpack.c.l.bf16 %v412
        %v429 = vunpack.c.l.bf16 %v413
        %v430 = vunpack.c.l.bf16 %v414
        %v431 = vunpack.c.l.bf16 %v415
        %v432 = vunpack.c.l.bf16 %v416
        %v433 = vunpack.c.l.bf16 %v417
        %v434 = vunpack.c.l.bf16 %v418
        %v435 = vunpack.c.l.bf16 %v419
        %v436 = vunpack.c.l.bf16 %v420
        %v437 = vadd.f32 %v388, %v421
        %v438 = vadd.f32 %v389, %v422
        %v439 = vadd.f32 %v390, %v423
        %v440 = vadd.f32 %v391, %v424
        %v441 = vadd.f32 %v392, %v425
        %v442 = vadd.f32 %v393, %v426
        %v443 = vadd.f32 %v394, %v427
        %v444 = vadd.f32 %v395, %v428
        %v445 = vadd.f32 %v396, %v429
        %v446 = vadd.f32 %v397, %v430
        %v447 = vadd.f32 %v398, %v431
        %v448 = vadd.f32 %v399, %v432
        %v449 = vadd.f32 %v400, %v433
        %v450 = vadd.f32 %v401, %v434
        %v451 = vadd.f32 %v402, %v435
        %v452 = vadd.f32 %v403, %v436
        %s453 = scalar_lea.vmem %s189, 20 [#allocation2]
        %v454 = vld [vmem:[%s453] sm:$0xf]
        %v455 = vld [vmem:[%s453 + $0x4] sm:$0xf]
        %v456 = vld [vmem:[%s453 + $0x20] sm:$0xf]
        %v457 = vld [vmem:[%s453 + $0x24] sm:$0xf]
        %v458 = vld [vmem:[%s453 + $0x40] sm:$0xf]
        %v459 = vld [vmem:[%s453 + $0x44] sm:$0xf]
        %v460 = vld [vmem:[%s453 + $0x60] sm:$0xf]
        %v461 = vld [vmem:[%s453 + $0x64] sm:$0xf]
        %v462 = vld [vmem:[%s453 + $0x80] sm:$0xf]
        %v463 = vld [vmem:[%s453 + $0x84] sm:$0xf]
        %v464 = vld [vmem:[%s453 + $0xa0] sm:$0xf]
        %v465 = vld [vmem:[%s453 + $0xa4] sm:$0xf]
        %v466 = vld [vmem:[%s453 + $0xc0] sm:$0xf]
        %v467 = vld [vmem:[%s453 + $0xc4] sm:$0xf]
        %v468 = vld [vmem:[%s453 + $0xe0] sm:$0xf]
        %v469 = vld [vmem:[%s453 + $0xe4] sm:$0xf]
        %v470 = vunpack.c.l.bf16 %v454
        %v471 = vunpack.c.l.bf16 %v455
        %v472 = vunpack.c.l.bf16 %v456
        %v473 = vunpack.c.l.bf16 %v457
        %v474 = vunpack.c.l.bf16 %v458
        %v475 = vunpack.c.l.bf16 %v459
        %v476 = vunpack.c.l.bf16 %v460
        %v477 = vunpack.c.l.bf16 %v461
        %v478 = vunpack.c.l.bf16 %v462
        %v479 = vunpack.c.l.bf16 %v463
        %v480 = vunpack.c.l.bf16 %v464
        %v481 = vunpack.c.l.bf16 %v465
        %v482 = vunpack.c.l.bf16 %v466
        %v483 = vunpack.c.l.bf16 %v467
        %v484 = vunpack.c.l.bf16 %v468
        %v485 = vunpack.c.l.bf16 %v469
        %v486 = vadd.f32 %v437, %v470
        %v487 = vadd.f32 %v438, %v471
        %v488 = vadd.f32 %v439, %v472
        %v489 = vadd.f32 %v440, %v473
        %v490 = vadd.f32 %v441, %v474
        %v491 = vadd.f32 %v442, %v475
        %v492 = vadd.f32 %v443, %v476
        %v493 = vadd.f32 %v444, %v477
        %v494 = vadd.f32 %v445, %v478
        %v495 = vadd.f32 %v446, %v479
        %v496 = vadd.f32 %v447, %v480
        %v497 = vadd.f32 %v448, %v481
        %v498 = vadd.f32 %v449, %v482
        %v499 = vadd.f32 %v450, %v483
        %v500 = vadd.f32 %v451, %v484
        %v501 = vadd.f32 %v452, %v485
        %s502 = scalar_lea.vmem %s189, 24 [#allocation2]
        %v503 = vld [vmem:[%s502] sm:$0xf]
        %v504 = vld [vmem:[%s502 + $0x4] sm:$0xf]
        %v505 = vld [vmem:[%s502 + $0x20] sm:$0xf]
        %v506 = vld [vmem:[%s502 + $0x24] sm:$0xf]
        %v507 = vld [vmem:[%s502 + $0x40] sm:$0xf]
        %v508 = vld [vmem:[%s502 + $0x44] sm:$0xf]
        %v509 = vld [vmem:[%s502 + $0x60] sm:$0xf]
        %v510 = vld [vmem:[%s502 + $0x64] sm:$0xf]
        %v511 = vld [vmem:[%s502 + $0x80] sm:$0xf]
        %v512 = vld [vmem:[%s502 + $0x84] sm:$0xf]
        %v513 = vld [vmem:[%s502 + $0xa0] sm:$0xf]
        %v514 = vld [vmem:[%s502 + $0xa4] sm:$0xf]
        %v515 = vld [vmem:[%s502 + $0xc0] sm:$0xf]
        %v516 = vld [vmem:[%s502 + $0xc4] sm:$0xf]
        %v517 = vld [vmem:[%s502 + $0xe0] sm:$0xf]
        %v518 = vld [vmem:[%s502 + $0xe4] sm:$0xf]
        %v519 = vunpack.c.l.bf16 %v503
        %v520 = vunpack.c.l.bf16 %v504
        %v521 = vunpack.c.l.bf16 %v505
        %v522 = vunpack.c.l.bf16 %v506
        %v523 = vunpack.c.l.bf16 %v507
        %v524 = vunpack.c.l.bf16 %v508
        %v525 = vunpack.c.l.bf16 %v509
        %v526 = vunpack.c.l.bf16 %v510
        %v527 = vunpack.c.l.bf16 %v511
        %v528 = vunpack.c.l.bf16 %v512
        %v529 = vunpack.c.l.bf16 %v513
        %v530 = vunpack.c.l.bf16 %v514
        %v531 = vunpack.c.l.bf16 %v515
        %v532 = vunpack.c.l.bf16 %v516
        %v533 = vunpack.c.l.bf16 %v517
        %v534 = vunpack.c.l.bf16 %v518
        %v535 = vadd.f32 %v486, %v519
        %v536 = vadd.f32 %v487, %v520
        %v537 = vadd.f32 %v488, %v521
        %v538 = vadd.f32 %v489, %v522
        %v539 = vadd.f32 %v490, %v523
        %v540 = vadd.f32 %v491, %v524
        %v541 = vadd.f32 %v492, %v525
        %v542 = vadd.f32 %v493, %v526
        %v543 = vadd.f32 %v494, %v527
        %v544 = vadd.f32 %v495, %v528
        %v545 = vadd.f32 %v496, %v529
        %v546 = vadd.f32 %v497, %v530
        %v547 = vadd.f32 %v498, %v531
        %v548 = vadd.f32 %v499, %v532
        %v549 = vadd.f32 %v500, %v533
        %v550 = vadd.f32 %v501, %v534
        %v567 = vrot.slane %v535, 1
        %v568 = vrot.slane %v536, 1
        %v569 = vrot.slane %v537, 1
        %v570 = vrot.slane %v538, 1
        %v571 = vrot.slane %v539, 1
        %v572 = vrot.slane %v540, 1
        %v573 = vrot.slane %v541, 1
        %v574 = vrot.slane %v542, 1
        %v575 = vrot.slane %v543, 1
        %v576 = vrot.slane %v544, 1
        %v577 = vrot.slane %v545, 1
        %v578 = vrot.slane %v546, 1
        %v579 = vrot.slane %v547, 1
        %v580 = vrot.slane %v548, 1
        %v581 = vrot.slane %v549, 1
        %v582 = vrot.slane %v550, 1
        %v599 = vadd.f32 %v535, %v567
        %v600 = vadd.f32 %v536, %v568
        %v601 = vadd.f32 %v537, %v569
        %v602 = vadd.f32 %v538, %v570
        %v603 = vadd.f32 %v539, %v571
        %v604 = vadd.f32 %v540, %v572
        %v605 = vadd.f32 %v541, %v573
        %v606 = vadd.f32 %v542, %v574
        %v607 = vadd.f32 %v543, %v575
        %v608 = vadd.f32 %v544, %v576
        %v609 = vadd.f32 %v545, %v577
        %v610 = vadd.f32 %v546, %v578
        %v611 = vadd.f32 %v547, %v579
        %v612 = vadd.f32 %v548, %v580
        %v613 = vadd.f32 %v549, %v581
        %v614 = vadd.f32 %v550, %v582
        %v615 = vrot.slane %v535, 2
        %v616 = vrot.slane %v536, 2
        %v617 = vrot.slane %v537, 2
        %v618 = vrot.slane %v538, 2
        %v619 = vrot.slane %v539, 2
        %v620 = vrot.slane %v540, 2
        %v621 = vrot.slane %v541, 2
        %v622 = vrot.slane %v542, 2
        %v623 = vrot.slane %v543, 2
        %v624 = vrot.slane %v544, 2
        %v625 = vrot.slane %v545, 2
        %v626 = vrot.slane %v546, 2
        %v627 = vrot.slane %v547, 2
        %v628 = vrot.slane %v548, 2
        %v629 = vrot.slane %v549, 2
        %v630 = vrot.slane %v550, 2
        %v647 = vadd.f32 %v599, %v615
        %v648 = vadd.f32 %v600, %v616
        %v649 = vadd.f32 %v601, %v617
        %v650 = vadd.f32 %v602, %v618
        %v651 = vadd.f32 %v603, %v619
        %v652 = vadd.f32 %v604, %v620
        %v653 = vadd.f32 %v605, %v621
        %v654 = vadd.f32 %v606, %v622
        %v655 = vadd.f32 %v607, %v623
        %v656 = vadd.f32 %v608, %v624
        %v657 = vadd.f32 %v609, %v625
        %v658 = vadd.f32 %v610, %v626
        %v659 = vadd.f32 %v611, %v627
        %v660 = vadd.f32 %v612, %v628
        %v661 = vadd.f32 %v613, %v629
        %v662 = vadd.f32 %v614, %v630
        %v663 = vrot.slane %v535, 3
        %v664 = vrot.slane %v536, 3
        %v665 = vrot.slane %v537, 3
        %v666 = vrot.slane %v538, 3
        %v667 = vrot.slane %v539, 3
        %v668 = vrot.slane %v540, 3
        %v669 = vrot.slane %v541, 3
        %v670 = vrot.slane %v542, 3
        %v671 = vrot.slane %v543, 3
        %v672 = vrot.slane %v544, 3
        %v673 = vrot.slane %v545, 3
        %v674 = vrot.slane %v546, 3
        %v675 = vrot.slane %v547, 3
        %v676 = vrot.slane %v548, 3
        %v677 = vrot.slane %v549, 3
        %v678 = vrot.slane %v550, 3
        %v695 = vadd.f32 %v647, %v663
        %v696 = vadd.f32 %v648, %v664
        %v697 = vadd.f32 %v649, %v665
        %v698 = vadd.f32 %v650, %v666
        %v699 = vadd.f32 %v651, %v667
        %v700 = vadd.f32 %v652, %v668
        %v701 = vadd.f32 %v653, %v669
        %v702 = vadd.f32 %v654, %v670
        %v703 = vadd.f32 %v655, %v671
        %v704 = vadd.f32 %v656, %v672
        %v705 = vadd.f32 %v657, %v673
        %v706 = vadd.f32 %v658, %v674
        %v707 = vadd.f32 %v659, %v675
        %v708 = vadd.f32 %v660, %v676
        %v709 = vadd.f32 %v661, %v677
        %v710 = vadd.f32 %v662, %v678
        %v711 = vrot.slane %v535, 4
        %v712 = vrot.slane %v536, 4
        %v713 = vrot.slane %v537, 4
        %v714 = vrot.slane %v538, 4
        %v715 = vrot.slane %v539, 4
        %v716 = vrot.slane %v540, 4
        %v717 = vrot.slane %v541, 4
        %v718 = vrot.slane %v542, 4
        %v719 = vrot.slane %v543, 4
        %v720 = vrot.slane %v544, 4
        %v721 = vrot.slane %v545, 4
        %v722 = vrot.slane %v546, 4
        %v723 = vrot.slane %v547, 4
        %v724 = vrot.slane %v548, 4
        %v725 = vrot.slane %v549, 4
        %v726 = vrot.slane %v550, 4
        %v743 = vadd.f32 %v695, %v711
        %v744 = vadd.f32 %v696, %v712
        %v745 = vadd.f32 %v697, %v713
        %v746 = vadd.f32 %v698, %v714
        %v747 = vadd.f32 %v699, %v715
        %v748 = vadd.f32 %v700, %v716
        %v749 = vadd.f32 %v701, %v717
        %v750 = vadd.f32 %v702, %v718
        %v751 = vadd.f32 %v703, %v719
        %v752 = vadd.f32 %v704, %v720
        %v753 = vadd.f32 %v705, %v721
        %v754 = vadd.f32 %v706, %v722
        %v755 = vadd.f32 %v707, %v723
        %v756 = vadd.f32 %v708, %v724
        %v757 = vadd.f32 %v709, %v725
        %v758 = vadd.f32 %v710, %v726
        %v759 = vrot.slane %v535, 5
        %v760 = vrot.slane %v536, 5
        %v761 = vrot.slane %v537, 5
        %v762 = vrot.slane %v538, 5
        %v763 = vrot.slane %v539, 5
        %v764 = vrot.slane %v540, 5
        %v765 = vrot.slane %v541, 5
        %v766 = vrot.slane %v542, 5
        %v767 = vrot.slane %v543, 5
        %v768 = vrot.slane %v544, 5
        %v769 = vrot.slane %v545, 5
        %v770 = vrot.slane %v546, 5
        %v771 = vrot.slane %v547, 5
        %v772 = vrot.slane %v548, 5
        %v773 = vrot.slane %v549, 5
        %v774 = vrot.slane %v550, 5
        %v791 = vadd.f32 %v743, %v759
        %v792 = vadd.f32 %v744, %v760
        %v793 = vadd.f32 %v745, %v761
        %v794 = vadd.f32 %v746, %v762
        %v795 = vadd.f32 %v747, %v763
        %v796 = vadd.f32 %v748, %v764
        %v797 = vadd.f32 %v749, %v765
        %v798 = vadd.f32 %v750, %v766
        %v799 = vadd.f32 %v751, %v767
        %v800 = vadd.f32 %v752, %v768
        %v801 = vadd.f32 %v753, %v769
        %v802 = vadd.f32 %v754, %v770
        %v803 = vadd.f32 %v755, %v771
        %v804 = vadd.f32 %v756, %v772
        %v805 = vadd.f32 %v757, %v773
        %v806 = vadd.f32 %v758, %v774
        %v807 = vrot.slane %v535, 6
        %v808 = vrot.slane %v536, 6
        %v809 = vrot.slane %v537, 6
        %v810 = vrot.slane %v538, 6
        %v811 = vrot.slane %v539, 6
        %v812 = vrot.slane %v540, 6
        %v813 = vrot.slane %v541, 6
        %v814 = vrot.slane %v542, 6
        %v815 = vrot.slane %v543, 6
        %v816 = vrot.slane %v544, 6
        %v817 = vrot.slane %v545, 6
        %v818 = vrot.slane %v546, 6
        %v819 = vrot.slane %v547, 6
        %v820 = vrot.slane %v548, 6
        %v821 = vrot.slane %v549, 6
        %v822 = vrot.slane %v550, 6
        %v839 = vadd.f32 %v791, %v807
        %v840 = vadd.f32 %v792, %v808
        %v841 = vadd.f32 %v793, %v809
        %v842 = vadd.f32 %v794, %v810
        %v843 = vadd.f32 %v795, %v811
        %v844 = vadd.f32 %v796, %v812
        %v845 = vadd.f32 %v797, %v813
        %v846 = vadd.f32 %v798, %v814
        %v847 = vadd.f32 %v799, %v815
        %v848 = vadd.f32 %v800, %v816
        %v849 = vadd.f32 %v801, %v817
        %v850 = vadd.f32 %v802, %v818
        %v851 = vadd.f32 %v803, %v819
        %v852 = vadd.f32 %v804, %v820
        %v853 = vadd.f32 %v805, %v821
        %v854 = vadd.f32 %v806, %v822
        %v855 = vmul.f32 %v839, 0.020408163
        %v856 = vmul.f32 %v840, 0.020408163
        %v857 = vmul.f32 %v841, 0.020408163
        %v858 = vmul.f32 %v842, 0.020408163
        %v859 = vmul.f32 %v843, 0.020408163
        %v860 = vmul.f32 %v844, 0.020408163
        %v861 = vmul.f32 %v845, 0.020408163
        %v862 = vmul.f32 %v846, 0.020408163
        %v863 = vmul.f32 %v847, 0.020408163
        %v864 = vmul.f32 %v848, 0.020408163
        %v865 = vmul.f32 %v849, 0.020408163
        %v866 = vmul.f32 %v850, 0.020408163
        %v867 = vmul.f32 %v851, 0.020408163
        %v868 = vmul.f32 %v852, 0.020408163
        %v869 = vmul.f32 %v853, 0.020408163
        %v870 = vmul.f32 %v854, 0.020408163
        %887 = vst [vmem:[#allocation1] ss:$4 sm:$0xff] %v855
        %s888 = scalar_lea.vmem [#allocation1], 1
        %889 = vst [vmem:[%s888] ss:$4 sm:$0xff] %v856
        %s890 = scalar_lea.vmem [#allocation1], 2
        %891 = vst [vmem:[%s890] ss:$4 sm:$0xff] %v857
        %s892 = scalar_lea.vmem [#allocation1], 3
        %893 = vst [vmem:[%s892] ss:$4 sm:$0xff] %v858
        %s894 = scalar_lea.vmem [#allocation1], 32
        %895 = vst [vmem:[%s894] ss:$4 sm:$0xff] %v859
        %s896 = scalar_lea.vmem [#allocation1], 33
        %897 = vst [vmem:[%s896] ss:$4 sm:$0xff] %v860
        %s898 = scalar_lea.vmem [#allocation1], 34
        %899 = vst [vmem:[%s898] ss:$4 sm:$0xff] %v861
        %s900 = scalar_lea.vmem [#allocation1], 35
        %901 = vst [vmem:[%s900] ss:$4 sm:$0xff] %v862
        %v902 = vld.sshfl [vmem:[#allocation1] sm:$0xff pattern:$0x73625140]
        %v903 = vld.sshfl [vmem:[#allocation1 + $0x20] sm:$0xff pattern:$0x73625140]
        %904 = vst [vmem:[#allocation1] ss:$4 sm:$0xff] %v863
        %905 = vst [vmem:[%s888] ss:$4 sm:$0xff] %v864
        %906 = vst [vmem:[%s890] ss:$4 sm:$0xff] %v865
        %907 = vst [vmem:[%s892] ss:$4 sm:$0xff] %v866
        %908 = vst [vmem:[%s894] ss:$4 sm:$0xff] %v867
        %909 = vst [vmem:[%s896] ss:$4 sm:$0xff] %v868
        %910 = vst [vmem:[%s898] ss:$4 sm:$0xff] %v869
        %911 = vst [vmem:[%s900] ss:$4 sm:$0xff] %v870
        %v912 = vld.sshfl [vmem:[#allocation1] sm:$0xff pattern:$0x73625140]
        %v913 = vld.sshfl [vmem:[#allocation1 + $0x20] sm:$0xff pattern:$0x73625140]
        %v918 = vpack.c.bf16 %v903, %v902
        %v919 = vpack.c.bf16 %v913, %v912
        %v920 = vld [vmem:[#allocation5] sm:$0xf]
        %v921 = vld [vmem:[#allocation5 + $0x4] sm:$0xf]
        %v922 = vld [vmem:[#allocation5 + $0x8] sm:$0xf]
        %v923 = vld [vmem:[#allocation5 + $0xc] sm:$0xf]
        %v928 = vunpack.c.l.b16 %v920
        %v929 = vunpack.c.l.b16 %v921
        %v930 = vunpack.c.l.b16 %v922
        %v931 = vunpack.c.l.b16 %v923
        %v932 = vpack.c.b16 %v929, %v928
        %v933 = vpack.c.b16 %v931, %v930
        %vm936 = vcmask 261120
        %v938 = vsel %vm936, %v918, 0
        %v941 = vsel %vm936, %v919, 0
        %943 = vmatpush.bf16.msra.mxu0 0
        %944 = vmatpush.bf16.msra.mxu0 0
        %945 = vmatpush.bf16.msra.mxu0 0
        %946 = vmatpush.bf16.msra.mxu0 0
        %947 = vmatpush.bf16.msra.mxu0 0
        %948 = vmatpush.bf16.msra.mxu0 0
        %949 = vmatpush.bf16.msra.mxu0 %v933
        %950 = vmatpush.bf16.msra.mxu0 %v932
        %951 = vmatmul.bf16.gmra.mxu0 %v938
        %v952 = vpop.f32.mrf.mxu0
        %v953 = vadd.f32 0.0, %v952
        %v954 = vpop.f32.mrf.mxu0
        %v955 = vadd.f32 0.0, %v954
        %956 = vmatmul.bf16.gmra.mxu0 %v941
        %v957 = vpop.f32.mrf.mxu0
        %v958 = vadd.f32 0.0, %v957
        %v959 = vpop.f32.mrf.mxu0
        %v960 = vadd.f32 0.0, %v959
        %961 = vdwg.mxu0
        %v966 = vrot.slane %v953, 4
        %v967 = vrot.slane %v955, 4
        %v968 = vrot.slane %v958, 4
        %v969 = vrot.slane %v960, 4
        %vm974 = vcmask 1043456
        %v975 = vsel %vm974, %v953, 0.0
        %v976 = vrot.slane %v975, 4
        %v977 = vadd.f32 %v975, %v976
        %v978 = vrot.slane %v977, 2
        %v979 = vadd.f32 %v977, %v978
        %v980 = vrot.slane %v979, 1
        %v981 = vadd.f32 %v979, %v980
        %v982 = vsel %vm974, %v966, 0.0
        %v983 = vrot.slane %v982, 4
        %v984 = vadd.f32 %v982, %v983
        %v985 = vrot.slane %v984, 2
        %v986 = vadd.f32 %v984, %v985
        %v987 = vrot.slane %v986, 1
        %v988 = vadd.f32 %v986, %v987
        %v989 = vsel %vm974, %v955, 0.0
        %v990 = vrot.slane %v989, 4
        %v991 = vadd.f32 %v989, %v990
        %v992 = vrot.slane %v991, 2
        %v993 = vadd.f32 %v991, %v992
        %v994 = vrot.slane %v993, 1
        %v995 = vadd.f32 %v993, %v994
        %v996 = vsel %vm974, %v967, 0.0
        %v997 = vrot.slane %v996, 4
        %v998 = vadd.f32 %v996, %v997
        %v999 = vrot.slane %v998, 2
        %v1000 = vadd.f32 %v998, %v999
        %v1001 = vrot.slane %v1000, 1
        %v1002 = vadd.f32 %v1000, %v1001
        %v1003 = vsel %vm974, %v958, 0.0
        %v1004 = vrot.slane %v1003, 4
        %v1005 = vadd.f32 %v1003, %v1004
        %v1006 = vrot.slane %v1005, 2
        %v1007 = vadd.f32 %v1005, %v1006
        %v1008 = vrot.slane %v1007, 1
        %v1009 = vadd.f32 %v1007, %v1008
        %v1010 = vsel %vm974, %v968, 0.0
        %v1011 = vrot.slane %v1010, 4
        %v1012 = vadd.f32 %v1010, %v1011
        %v1013 = vrot.slane %v1012, 2
        %v1014 = vadd.f32 %v1012, %v1013
        %v1015 = vrot.slane %v1014, 1
        %v1016 = vadd.f32 %v1014, %v1015
        %v1017 = vsel %vm974, %v960, 0.0
        %v1018 = vrot.slane %v1017, 4
        %v1019 = vadd.f32 %v1017, %v1018
        %v1020 = vrot.slane %v1019, 2
        %v1021 = vadd.f32 %v1019, %v1020
        %v1022 = vrot.slane %v1021, 1
        %v1023 = vadd.f32 %v1021, %v1022
        %v1024 = vsel %vm974, %v969, 0.0
        %v1025 = vrot.slane %v1024, 4
        %v1026 = vadd.f32 %v1024, %v1025
        %v1027 = vrot.slane %v1026, 2
        %v1028 = vadd.f32 %v1026, %v1027
        %v1029 = vrot.slane %v1028, 1
        %v1030 = vadd.f32 %v1028, %v1029
        %v1031 = vrcp.pop 4.0
        %v1032 = vmul.f32 4.0, %v1031
        %v1033 = vsub.f32 1.0, %v1032
        %v1034 = vmul.f32 %v1031, %v1033
        %v1035 = vadd.f32 %v1031, %v1034
        %vm1036 = vweird.f32 %v1031
        %v1037 = vsel %vm1036, %v1031, %v1035
        %v1038 = vmul.f32 %v981, %v1037
        %v1039 = vmul.f32 %v988, %v1037
        %v1040 = vmul.f32 %v995, %v1037
        %v1041 = vmul.f32 %v1002, %v1037
        %v1042 = vmul.f32 %v1009, %v1037
        %v1043 = vmul.f32 %v1016, %v1037
        %v1044 = vmul.f32 %v1023, %v1037
        %v1045 = vmul.f32 %v1030, %v1037
        %v1046 = vsel %vm974, %v953, -inf
        %v1047 = vrot.slane %v1046, 4
        %v1048 = vmax.f32 %v1046, %v1047
        %v1049 = vrot.slane %v1048, 2
        %v1050 = vmax.f32 %v1048, %v1049
        %v1051 = vrot.slane %v1050, 1
        %v1052 = vmax.f32 %v1050, %v1051
        %v1053 = vsel %vm974, %v966, -inf
        %v1054 = vrot.slane %v1053, 4
        %v1055 = vmax.f32 %v1053, %v1054
        %v1056 = vrot.slane %v1055, 2
        %v1057 = vmax.f32 %v1055, %v1056
        %v1058 = vrot.slane %v1057, 1
        %v1059 = vmax.f32 %v1057, %v1058
        %v1060 = vsel %vm974, %v955, -inf
        %v1061 = vrot.slane %v1060, 4
        %v1062 = vmax.f32 %v1060, %v1061
        %v1063 = vrot.slane %v1062, 2
        %v1064 = vmax.f32 %v1062, %v1063
        %v1065 = vrot.slane %v1064, 1
        %v1066 = vmax.f32 %v1064, %v1065
        %v1067 = vsel %vm974, %v967, -inf
        %v1068 = vrot.slane %v1067, 4
        %v1069 = vmax.f32 %v1067, %v1068
        %v1070 = vrot.slane %v1069, 2
        %v1071 = vmax.f32 %v1069, %v1070
        %v1072 = vrot.slane %v1071, 1
        %v1073 = vmax.f32 %v1071, %v1072
        %v1074 = vsel %vm974, %v958, -inf
        %v1075 = vrot.slane %v1074, 4
        %v1076 = vmax.f32 %v1074, %v1075
        %v1077 = vrot.slane %v1076, 2
        %v1078 = vmax.f32 %v1076, %v1077
        %v1079 = vrot.slane %v1078, 1
        %v1080 = vmax.f32 %v1078, %v1079
        %v1081 = vsel %vm974, %v968, -inf
        %v1082 = vrot.slane %v1081, 4
        %v1083 = vmax.f32 %v1081, %v1082
        %v1084 = vrot.slane %v1083, 2
        %v1085 = vmax.f32 %v1083, %v1084
        %v1086 = vrot.slane %v1085, 1
        %v1087 = vmax.f32 %v1085, %v1086
        %v1088 = vsel %vm974, %v960, -inf
        %v1089 = vrot.slane %v1088, 4
        %v1090 = vmax.f32 %v1088, %v1089
        %v1091 = vrot.slane %v1090, 2
        %v1092 = vmax.f32 %v1090, %v1091
        %v1093 = vrot.slane %v1092, 1
        %v1094 = vmax.f32 %v1092, %v1093
        %v1095 = vsel %vm974, %v969, -inf
        %v1096 = vrot.slane %v1095, 4
        %v1097 = vmax.f32 %v1095, %v1096
        %v1098 = vrot.slane %v1097, 2
        %v1099 = vmax.f32 %v1097, %v1098
        %v1100 = vrot.slane %v1099, 1
        %v1101 = vmax.f32 %v1099, %v1100
        %v1102 = vadd.f32 %v1038, %v1052
        %v1103 = vadd.f32 %v1039, %v1059
        %v1104 = vadd.f32 %v1040, %v1066
        %v1105 = vadd.f32 %v1041, %v1073
        %v1106 = vadd.f32 %v1042, %v1080
        %v1107 = vadd.f32 %v1043, %v1087
        %v1108 = vadd.f32 %v1044, %v1094
        %v1109 = vadd.f32 %v1045, %v1101
        %v1110 = vmul.f32 %v1102, 0.5
        %v1111 = vmul.f32 %v1103, 0.5
        %v1112 = vmul.f32 %v1104, 0.5
        %v1113 = vmul.f32 %v1105, 0.5
        %v1114 = vmul.f32 %v1106, 0.5
        %v1115 = vmul.f32 %v1107, 0.5
        %v1116 = vmul.f32 %v1108, 0.5
        %v1117 = vmul.f32 %v1109, 0.5
        %v1118 = vld [vmem:[%s2] sm:$0x1]
        %v1120 = vperm.slane %v1118, 0
        %v1122 = vadd.f32 %v1110, %v1120
        %v1123 = vadd.f32 %v1111, %v1120
        %v1124 = vadd.f32 %v1112, %v1120
        %v1125 = vadd.f32 %v1113, %v1120
        %v1126 = vadd.f32 %v1114, %v1120
        %v1127 = vadd.f32 %v1115, %v1120
        %v1128 = vadd.f32 %v1116, %v1120
        %v1129 = vadd.f32 %v1117, %v1120
        %v1138 = vrot.slane %v1123, 7
        %vm1139 = vcmask 1041409
        %v1140 = vsel %vm1139, %v1138, %v1122
        %v1141 = vrot.slane %v1124, 6
        %vm1142 = vcmask 1042434
        %v1143 = vsel %vm1142, %v1141, %v1140
        %v1144 = vrot.slane %v1125, 5
        %vm1145 = vcmask 1043459
        %v1146 = vsel %vm1145, %v1144, %v1143
        %v1147 = vrot.slane %v1126, 4
        %vm1148 = vcmask 1044484
        %v1149 = vsel %vm1148, %v1147, %v1146
        %v1150 = vrot.slane %v1127, 3
        %vm1151 = vcmask 1045509
        %v1152 = vsel %vm1151, %v1150, %v1149
        %v1153 = vrot.slane %v1128, 2
        %vm1154 = vcmask 1046534
        %v1155 = vsel %vm1154, %v1153, %v1152
        %v1156 = vrot.slane %v1129, 1
        %vm1157 = vcmask 1047559
        %v1158 = vsel %vm1157, %v1156, %v1155
        %1160 = vst [vmem:[%s217] sm:$0xff] %v1158
        %s1161 = sand.u32 %s97, 1
        %s1162 = scalar_lea.sflag [#allocation4], %s1161
        %s1163 = sand.u32 %s97, 1
        %s1164 = smul.addr %s1163, 8
        %s1165 = scalar_lea.vmem [#allocation7], %s1164
        // Predicated region
        $region41: #{tpu_custom_call.1} parent=31 // pred_check
          %p1166 = pneg %p107
        $region42: #{tpu_custom_call.1} parent=31 // pred_check_branch
          %1168 = sbr.rel (%p1166) target = $region44
        $region43: #{tpu_custom_call.1} parent=31 // pred_region
          %1170 = vsyncadd %s1162, 0
          %s1171 = smul.addr %s21, 8
          %s1172 = scalar_lea.hbm %s3, %s1171
          %s1174 = sshll.u32 %s1165, 4
          %s1175 = int_to_ptr.vmem [resolvable:$true] %s1174
          %s1176 = sshll.u32 %s1172, 4
          %s1177 = int_to_ptr.hbm [resolvable:$true] %s1176
          %1179 = dma.vmem_to_hbm [thread:$0]  %s1175, 128, %s1177, %s1162
        $region44: #{tpu_custom_call.1} parent=31 // pred_fallthru
          _
      $region32: #{tpu_custom_call.1} parent=5 // pred_fallthru
        _
      %p1180 = scmp.le.s32.totalorder 2, %s16
      // Predicated region
      $region45: #{tpu_custom_call.1} parent=5 // pred_check
        %p1181 = pneg %p1180
      $region46: #{tpu_custom_call.1} parent=5 // pred_check_branch
        %1183 = sbr.rel (%p1181) target = $region48
      $region47: #{tpu_custom_call.1} parent=5 // pred_region
        %s1184 = ssub.s32 %s16, 2
        // Predicated region
        $region49: #{tpu_custom_call.1} parent=47 // pred_check
          %p1185 = pneg %p113
        $region50: #{tpu_custom_call.1} parent=47 // pred_check_branch
          %1187 = sbr.rel (%p1185) target = $region52
        $region51: #{tpu_custom_call.1} parent=47 // pred_region
          %s1188 = sand.u32 %s98, 1
          %s1189 = scalar_lea.sflag [#allocation4], %s1188
          %s1190 = sand.u32 %s98, 1
          %s1191 = smul.addr %s1190, 8
          %s1192 = scalar_lea.vmem [#allocation7], %s1191
          %1194 = dma.done %s1189, 128
        $region52: #{tpu_custom_call.1} parent=47 // pred_fallthru
          _
      $region48: #{tpu_custom_call.1} parent=5 // pred_fallthru
        _
    $region6: #{tpu_custom_call.1} parent=1 // loop_footer
      %s20 = sadd.s32 1, %s16
    $region7: #{tpu_custom_call.1} parent=1 // loop_footer_branch
      %15 = sbr.rel target = $region3
    $region8: #{tpu_custom_call.1} parent=1 // loop_exit
      _
    %1195 = vsyncpa [#allocation3], 1
    %s1196 = scalar_lea.sflag [#allocation3], 1
    %1197 = vsyncpa %s1196, 1
    %1198 = vsyncpa [#allocation6], 1
    %1199 = vsyncpa [#allocation4], 1
    %s1200 = scalar_lea.sflag [#allocation4], 1
    %1201 = vsyncpa %s1200, 1

</llo_original>
